<compile_context>
chip_gen: v6e
topology: v6e:2x2x1
jax: 0.10.0
libtpu: 0.0.40
codegen_flags: <defaults>
</compile_context>

<pallas_src>
import functools

import jax
import jax.numpy as jnp
from jax.experimental import pallas as pl
from jax.experimental.pallas import tpu as pltpu


def _round_up(x, m):
    return ((x + m - 1) // m) * m


def _cdiv(a, b):
    return -(-a // b)


def _default_grid_steps():
    # v7x has 2 TensorCores per chip -> give each one a batch tile.
    # v5e/v6e are single-TC: one maximal grid step minimizes per-step overhead.
    try:
        kind = jax.devices()[0].device_kind.lower()
    except Exception:
        return 1
    return 2 if "v7" in kind else 1


def _vae_kernel(
    x_ref, eps_ref,
    w_in_ref, b_in_ref,          # [input_dim, h_dim],   [1, h_dim]
    w_musig_ref, b_musig_ref,    # [h_dim, 2*z_dim],     [1, 2*z_dim]
    w_zh_ref, b_zh_ref,          # [z_dim, h_dim+1],     [1, h_dim+1]   (fitness folded)
    w_out_ref, b_out_ref,        # [h_dim+1, input_dim] (last row 0),  [1, input_dim]
    out_ref,                     # packed [tile_b, out_w] lane-dense f32 slab
    *, z_dim, h_dim, input_dim, pad_lanes,
):
    x = x_ref[...]               # already bf16
    eps = eps_ref[...]           # f32

    # ---- encoder: h = relu(x @ W_in + b_in) --------------------------------
    h = jnp.dot(x, w_in_ref[...], preferred_element_type=jnp.float32) + b_in_ref[...]
    h = jnp.maximum(h, 0.0)

    # ---- fused mu||sigma head: one matmul instead of two -------------------
    ms = jnp.dot(h.astype(jnp.bfloat16), w_musig_ref[...],
                 preferred_element_type=jnp.float32) + b_musig_ref[...]
    mu = ms[:, :z_dim]
    sigma = ms[:, z_dim:]

    # ---- reparameterize (f32 VPU/EUP; eps ~ U[0,1) like torch.rand_like) ---
    z = mu + jnp.exp(sigma * 0.5) * eps

    # ---- decoder 1st layer with the fitness head folded in:
    #      z @ [w_z2h | w_fit]; columns 0..h_dim-1 feed the decoder,
    #      column h_dim (pre-ReLU) is pred_value.
    hp = jnp.dot(z.astype(jnp.bfloat16), w_zh_ref[...],
                 preferred_element_type=jnp.float32) + b_zh_ref[...]
    pred = hp[:, h_dim:h_dim + 1]
    hd = jnp.maximum(hp, 0.0)    # relu'd pred column is nulled by w_out's zero row

    logits = jnp.dot(hd.astype(jnp.bfloat16), w_out_ref[...],
                     preferred_element_type=jnp.float32) + b_out_ref[...]
    recon = jax.nn.sigmoid(logits)

    # ---- lane-dense packed output via static sub-slab stores ---------------
    tb = out_ref.shape[0]
    out_ref[:, :input_dim] = recon
    out_ref[:, input_dim:input_dim + 2 * z_dim] = ms
    out_ref[:, input_dim + 2 * z_dim:input_dim + 2 * z_dim + 1] = pred
    if pad_lanes > 0:
        out_ref[:, input_dim + 2 * z_dim + 1:] = jnp.zeros((tb, pad_lanes), jnp.float32)


def vae_forward(x, eps, params, *, grid_steps=None):
    """x: [B, input_dim] f32, eps: [B, z_dim] f32 ~ U[0,1).

    Returns (x_reconstruido, mu, sigma, pred_value) as f32 arrays.
    """
    B, input_dim = x.shape
    z_dim = eps.shape[1]
    h_dim = params["w_in"].shape[1]

    packed_w = input_dim + 2 * z_dim + 1
    out_w = _round_up(packed_w, 128)
    pad_lanes = out_w - packed_w

    if grid_steps is None:
        grid_steps = _default_grid_steps()

    # One maximal batch tile per grid step (per-step overhead ~0.35us dominates
    # at these matmul sizes). Cap the tile so double-buffered x/eps/out tiles
    # stay comfortably inside VMEM on every generation (v7x: 64 MiB physical).
    tile_b = _round_up(_cdiv(B, grid_steps), 8)
    row_bytes = 2 * (input_dim * 2 + z_dim * 4 + out_w * 4)   # double-buffered
    max_tile_b = max(8, ((40 << 20) // row_bytes) // 8 * 8)
    if tile_b > max_tile_b:
        tile_b = max_tile_b
        grid_steps = _cdiv(B, tile_b)
    b_pad = tile_b * grid_steps

    x = x.astype(jnp.bfloat16)   # weights are bf16; halves the x DMA stream
    if b_pad != B:
        x = jnp.pad(x, ((0, b_pad - B), (0, 0)))
        eps = jnp.pad(eps, ((0, b_pad - B), (0, 0)))

    weights = (
        params["w_in"], params["b_in"],
        params["w_musig"], params["b_musig"],
        params["w_zh"], params["b_zh"],
        params["w_out"], params["b_out"],
    )
    weight_bytes = sum(int(w.size) * w.dtype.itemsize for w in weights)

    # Activations/output tiled along batch; weights full-block, same block index
    # every step -> DMA'd into VMEM once and resident thereafter.
    def resident(a):
        return pl.BlockSpec(a.shape, lambda i: (0, 0))

    in_specs = [
        pl.BlockSpec((tile_b, input_dim), lambda i: (i, 0)),  # x (bf16)
        pl.BlockSpec((tile_b, z_dim), lambda i: (i, 0)),      # eps (f32)
    ] + [resident(w) for w in weights]
    out_spec = pl.BlockSpec((tile_b, out_w), lambda i: (i, 0))

    flops = 2 * b_pad * (
        input_dim * h_dim          # entrada
        + h_dim * 2 * z_dim        # fused mu||sigma
        + z_dim * (h_dim + 1)      # z -> hidden (+ folded fitness column)
        + (h_dim + 1) * input_dim  # output
    )
    transcendentals = b_pad * (z_dim + input_dim)   # exp (reparam) + sigmoid
    bytes_accessed = (
        x.size * x.dtype.itemsize
        + eps.size * eps.dtype.itemsize
        + weight_bytes
        + b_pad * out_w * 4
    )

    needed_vmem = row_bytes * tile_b + 2 * weight_bytes + (2 << 20)
    vmem_limit = int(min(max(needed_vmem, 32 << 20), 48 << 20))

    kernel = functools.partial(_vae_kernel, z_dim=z_dim, h_dim=h_dim,
                               input_dim=input_dim, pad_lanes=pad_lanes)

    packed = pl.pallas_call(
        kernel,
        out_shape=jax.ShapeDtypeStruct((b_pad, out_w), jnp.float32),
        grid=(grid_steps,),
        in_specs=in_specs,
        out_specs=out_spec,
        compiler_params=pltpu.CompilerParams(
            dimension_semantics=("parallel",),      # v7x megacore shards the tiles
            vmem_limit_bytes=vmem_limit,            # v5e default is only 16 MiB
        ),
        cost_estimate=pl.CostEstimate(
            flops=flops,
            transcendentals=transcendentals,
            bytes_accessed=bytes_accessed,
        ),
    )(x, eps, *weights)

    # Unpack the lane-dense slab in the wrapper (layout plumbing, not compute).
    recon = packed[:B, :input_dim]
    mu = packed[:B, input_dim:input_dim + z_dim]
    sigma = packed[:B, input_dim + z_dim:input_dim + 2 * z_dim]
    pred = packed[:B, input_dim + 2 * z_dim:input_dim + 2 * z_dim + 1]
    return recon, mu, sigma, pred


def init_params(key, input_dim, h_dim, z_dim):
    """Deterministic synthetic init matching torch.nn.Linear's default.

    Weights stored [in, out] (pre-transposed vs torch) in bf16 for the MXU;
    biases stay f32. mu/sigma packed into one [h_dim, 2*z_dim] head; the
    fitness column is folded into the z->hidden weight, and w_out gets an
    extra zero row so the relu'd fitness column contributes nothing.
    """
    ks = jax.random.split(key, 6)

    def lin(k, fan_in, fan_out):
        bound = 1.0 / jnp.sqrt(fan_in)
        kw, kb = jax.random.split(k)
        w = jax.random.uniform(kw, (fan_in, fan_out), jnp.float32, -bound, bound)
        b = jax.random.uniform(kb, (1, fan_out), jnp.float32, -bound, bound)
        return w, b

    w_in, b_in = lin(ks[0], input_dim, h_dim)
    w_mu, b_mu = lin(ks[1], h_dim, z_dim)
    w_sig, b_sig = lin(ks[2], h_dim, z_dim)
    w_fit, b_fit = lin(ks[3], z_dim, 1)            # [z_dim, 1], [1, 1]
    w_z2h, b_z2h = lin(ks[4], z_dim, h_dim)
    w_out, b_out = lin(ks[5], h_dim, input_dim)

    w_zh = jnp.concatenate([w_z2h, w_fit], axis=1)           # [z_dim, h_dim+1]
    b_zh = jnp.concatenate([b_z2h, b_fit], axis=1)           # [1, h_dim+1]
    w_out_ext = jnp.concatenate(
        [w_out, jnp.zeros((1, input_dim), jnp.float32)], axis=0)  # [h_dim+1, input_dim]

    return {
        "w_in": w_in.astype(jnp.bfloat16), "b_in": b_in,
        "w_musig": jnp.concatenate([w_mu, w_sig], axis=1).astype(jnp.bfloat16),
        "b_musig": jnp.concatenate([b_mu, b_sig], axis=1),
        "w_zh": w_zh.astype(jnp.bfloat16), "b_zh": b_zh,
        "w_out": w_out_ext.astype(jnp.bfloat16), "b_out": b_out,
    }


def _reference(x, eps, p, *, z_dim, h_dim):
    """Pure-JAX reference using the same bf16-operand / f32-accumulate math."""
    def dot(a, w):
        return jnp.dot(a.astype(jnp.bfloat16), w, preferred_element_type=jnp.float32)

    h = jnp.maximum(dot(x, p["w_in"]) + p["b_in"], 0.0)
    ms = dot(h, p["w_musig"]) + p["b_musig"]
    mu, sigma = ms[:, :z_dim], ms[:, z_dim:]
    z = mu + jnp.exp(sigma / 2.0) * eps
    hp = dot(z, p["w_zh"]) + p["b_zh"]
    pred = hp[:, h_dim:h_dim + 1]
    hd = jnp.maximum(hp, 0.0)
    recon = jax.nn.sigmoid(dot(hd, p["w_out"]) + p["b_out"])
    return recon, mu, sigma, pred


if __name__ == "__main__":
    input_dim, h_dim, z_dim = 64, 32, 16
    batch = 256   # one grid step of 256 rows (two 128-row steps on v7x)

    key = jax.random.PRNGKey(0)
    k_x, k_eps, k_p = jax.random.split(key, 3)

    x = jax.random.normal(k_x, (batch, input_dim), jnp.float32)
    # epsilon ~ U[0,1), matching torch.rand_like(sigma)
    eps = jax.random.uniform(k_eps, (batch, z_dim), jnp.float32)
    params = init_params(k_p, input_dim, h_dim, z_dim)

    recon, mu, sigma, pred = jax.block_until_ready(vae_forward(x, eps, params))

    r_recon, r_mu, r_sigma, r_pred = _reference(x, eps, params, z_dim=z_dim, h_dim=h_dim)
    assert recon.shape == (batch, input_dim)
    assert mu.shape == (batch, z_dim) and sigma.shape == (batch, z_dim)
    assert pred.shape == (batch, 1)
    assert jnp.allclose(recon, r_recon, atol=2e-3, rtol=2e-3)
    assert jnp.allclose(mu, r_mu, atol=2e-3, rtol=2e-3)
    assert jnp.allclose(sigma, r_sigma, atol=2e-3, rtol=2e-3)
    assert jnp.allclose(pred, r_pred, atol=2e-3, rtol=2e-3)

    print("KERNEL_OK")
</pallas_src>

<mosaic_0001>
module attributes {stable_mosaic.version = 11 : i64} {
  func.func @_vae_kernel(%arg0: i32, %arg1: memref<256x64xbf16, #tpu.memory_space<vmem>>, %arg2: memref<256x16xf32, #tpu.memory_space<vmem>>, %arg3: memref<64x32xbf16, #tpu.memory_space<vmem>>, %arg4: memref<1x32xf32, #tpu.memory_space<vmem>>, %arg5: memref<32x32xbf16, #tpu.memory_space<vmem>>, %arg6: memref<1x32xf32, #tpu.memory_space<vmem>>, %arg7: memref<16x33xbf16, #tpu.memory_space<vmem>>, %arg8: memref<1x33xf32, #tpu.memory_space<vmem>>, %arg9: memref<33x64xbf16, #tpu.memory_space<vmem>>, %arg10: memref<1x64xf32, #tpu.memory_space<vmem>>, %arg11: memref<256x128xf32, #tpu.memory_space<vmem>>) attributes {dimension_semantics = [#tpu.dimension_semantics<parallel>], iteration_bounds = array<i64: 1>, scalar_prefetch = 0 : i64, scratch_operands = 0 : i64, tpu.core_type = #tpu.core_type<tc>, window_params = [{transform_indices = @transform_0, window_bounds = array<i64: 256, 64>}, {transform_indices = @transform_1, window_bounds = array<i64: 256, 16>}, {pipeline_mode = #tpu.pipeline_mode<synchronous>, transform_indices = @transform_2, window_bounds = array<i64: 64, 32>}, {pipeline_mode = #tpu.pipeline_mode<synchronous>, transform_indices = @transform_3, window_bounds = array<i64: 1, 32>}, {pipeline_mode = #tpu.pipeline_mode<synchronous>, transform_indices = @transform_4, window_bounds = array<i64: 32, 32>}, {pipeline_mode = #tpu.pipeline_mode<synchronous>, transform_indices = @transform_5, window_bounds = array<i64: 1, 32>}, {pipeline_mode = #tpu.pipeline_mode<synchronous>, transform_indices = @transform_6, window_bounds = array<i64: 16, 33>}, {pipeline_mode = #tpu.pipeline_mode<synchronous>, transform_indices = @transform_7, window_bounds = array<i64: 1, 33>}, {pipeline_mode = #tpu.pipeline_mode<synchronous>, transform_indices = @transform_8, window_bounds = array<i64: 33, 64>}, {pipeline_mode = #tpu.pipeline_mode<synchronous>, transform_indices = @transform_9, window_bounds = array<i64: 1, 64>}, {transform_indices = @transform_10, window_bounds = array<i64: 256, 128>}]} {
    %c0 = arith.constant 0 : index
    %c0_0 = arith.constant 0 : index
    %0 = vector.load %arg1[%c0, %c0_0] : memref<256x64xbf16, #tpu.memory_space<vmem>>, vector<256x64xbf16>
    %c0_1 = arith.constant 0 : index
    %c0_2 = arith.constant 0 : index
    %1 = vector.load %arg2[%c0_1, %c0_2] : memref<256x16xf32, #tpu.memory_space<vmem>>, vector<256x16xf32>
    %c0_3 = arith.constant 0 : index
    %c0_4 = arith.constant 0 : index
    %2 = vector.load %arg3[%c0_3, %c0_4] : memref<64x32xbf16, #tpu.memory_space<vmem>>, vector<64x32xbf16>
    %cst = arith.constant dense<0.000000e+00> : vector<256x32xf32>
    %3 = tpu.matmul %0, %2, %cst {dimension_numbers = #tpu.dot_dimension_numbers<[1], [0], [0], [1], [0, 0, 1, 1], [], []>} : vector<256x64xbf16>, vector<64x32xbf16>, vector<256x32xf32> -> vector<256x32xf32>
    %c0_5 = arith.constant 0 : index
    %c0_6 = arith.constant 0 : index
    %4 = vector.load %arg4[%c0_5, %c0_6] : memref<1x32xf32, #tpu.memory_space<vmem>>, vector<1x32xf32>
    %5 = vector.broadcast %4 : vector<1x32xf32> to vector<256x32xf32>
    %6 = arith.addf %3, %5 : vector<256x32xf32>
    %cst_7 = arith.constant 0.000000e+00 : f32
    %7 = vector.broadcast %cst_7 : f32 to vector<256x32xf32>
    %8 = arith.maximumf %6, %7 : vector<256x32xf32>
    %9 = arith.truncf %8 : vector<256x32xf32> to vector<256x32xbf16>
    %c0_8 = arith.constant 0 : index
    %c0_9 = arith.constant 0 : index
    %10 = vector.load %arg5[%c0_8, %c0_9] : memref<32x32xbf16, #tpu.memory_space<vmem>>, vector<32x32xbf16>
    %cst_10 = arith.constant dense<0.000000e+00> : vector<256x32xf32>
    %11 = tpu.matmul %9, %10, %cst_10 {dimension_numbers = #tpu.dot_dimension_numbers<[1], [0], [0], [1], [0, 0, 1, 1], [], []>} : vector<256x32xbf16>, vector<32x32xbf16>, vector<256x32xf32> -> vector<256x32xf32>
    %c0_11 = arith.constant 0 : index
    %c0_12 = arith.constant 0 : index
    %12 = vector.load %arg6[%c0_11, %c0_12] : memref<1x32xf32, #tpu.memory_space<vmem>>, vector<1x32xf32>
    %13 = vector.broadcast %12 : vector<1x32xf32> to vector<256x32xf32>
    %14 = arith.addf %11, %13 : vector<256x32xf32>
    %15 = vector.extract_strided_slice %14 {offsets = [0, 0], sizes = [256, 16], strides = [1, 1]} : vector<256x32xf32> to vector<256x16xf32>
    %16 = vector.extract_strided_slice %14 {offsets = [0, 16], sizes = [256, 16], strides = [1, 1]} : vector<256x32xf32> to vector<256x16xf32>
    %cst_13 = arith.constant 5.000000e-01 : f32
    %17 = vector.broadcast %cst_13 : f32 to vector<256x16xf32>
    %18 = arith.mulf %16, %17 : vector<256x16xf32>
    %19 = math.exp %18 : vector<256x16xf32>
    %20 = arith.mulf %19, %1 : vector<256x16xf32>
    %21 = arith.addf %15, %20 : vector<256x16xf32>
    %22 = arith.truncf %21 : vector<256x16xf32> to vector<256x16xbf16>
    %c0_14 = arith.constant 0 : index
    %c0_15 = arith.constant 0 : index
    %23 = vector.load %arg7[%c0_14, %c0_15] : memref<16x33xbf16, #tpu.memory_space<vmem>>, vector<16x33xbf16>
    %cst_16 = arith.constant dense<0.000000e+00> : vector<256x33xf32>
    %24 = tpu.matmul %22, %23, %cst_16 {dimension_numbers = #tpu.dot_dimension_numbers<[1], [0], [0], [1], [0, 0, 1, 1], [], []>} : vector<256x16xbf16>, vector<16x33xbf16>, vector<256x33xf32> -> vector<256x33xf32>
    %c0_17 = arith.constant 0 : index
    %c0_18 = arith.constant 0 : index
    %25 = vector.load %arg8[%c0_17, %c0_18] : memref<1x33xf32, #tpu.memory_space<vmem>>, vector<1x33xf32>
    %26 = vector.broadcast %25 : vector<1x33xf32> to vector<256x33xf32>
    %27 = arith.addf %24, %26 : vector<256x33xf32>
    %28 = vector.extract_strided_slice %27 {offsets = [0, 32], sizes = [256, 1], strides = [1, 1]} : vector<256x33xf32> to vector<256x1xf32>
    %cst_19 = arith.constant 0.000000e+00 : f32
    %29 = vector.broadcast %cst_19 : f32 to vector<256x33xf32>
    %30 = arith.maximumf %27, %29 : vector<256x33xf32>
    %31 = arith.truncf %30 : vector<256x33xf32> to vector<256x33xbf16>
    %c0_20 = arith.constant 0 : index
    %c0_21 = arith.constant 0 : index
    %32 = vector.load %arg9[%c0_20, %c0_21] : memref<33x64xbf16, #tpu.memory_space<vmem>>, vector<33x64xbf16>
    %cst_22 = arith.constant dense<0.000000e+00> : vector<256x64xf32>
    %33 = tpu.matmul %31, %32, %cst_22 {dimension_numbers = #tpu.dot_dimension_numbers<[1], [0], [0], [1], [0, 0, 1, 1], [], []>} : vector<256x33xbf16>, vector<33x64xbf16>, vector<256x64xf32> -> vector<256x64xf32>
    %c0_23 = arith.constant 0 : index
    %c0_24 = arith.constant 0 : index
    %34 = vector.load %arg10[%c0_23, %c0_24] : memref<1x64xf32, #tpu.memory_space<vmem>>, vector<1x64xf32>
    %35 = vector.broadcast %34 : vector<1x64xf32> to vector<256x64xf32>
    %36 = arith.addf %33, %35 : vector<256x64xf32>
    %37 = arith.negf %36 : vector<256x64xf32>
    %38 = math.exp %37 : vector<256x64xf32>
    %cst_25 = arith.constant 1.000000e+00 : f32
    %39 = vector.broadcast %cst_25 : f32 to vector<256x64xf32>
    %40 = arith.addf %39, %38 : vector<256x64xf32>
    %41 = arith.divf %39, %40 : vector<256x64xf32>
    %c0_26 = arith.constant 0 : index
    %c0_27 = arith.constant 0 : index
    %42 = vector.load %arg11[%c0_26, %c0_27] : memref<256x128xf32, #tpu.memory_space<vmem>>, vector<256x64xf32>
    tpu.vector_store %arg11[%c0_26, %c0_27], %41 {strides = array<i32>} : memref<256x128xf32, #tpu.memory_space<vmem>>, vector<256x64xf32>,
    %c0_28 = arith.constant 0 : index
    %c64 = arith.constant 64 : index
    %43 = vector.load %arg11[%c0_28, %c64] : memref<256x128xf32, #tpu.memory_space<vmem>>, vector<256x32xf32>
    tpu.vector_store %arg11[%c0_28, %c64], %14 {strides = array<i32>} : memref<256x128xf32, #tpu.memory_space<vmem>>, vector<256x32xf32>,
    %c0_29 = arith.constant 0 : index
    %c96 = arith.constant 96 : index
    %44 = vector.load %arg11[%c0_29, %c96] : memref<256x128xf32, #tpu.memory_space<vmem>>, vector<256x1xf32>
    tpu.vector_store %arg11[%c0_29, %c96], %28 {strides = array<i32>} : memref<256x128xf32, #tpu.memory_space<vmem>>, vector<256x1xf32>,
    %cst_30 = arith.constant 0.000000e+00 : f32
    %45 = vector.broadcast %cst_30 : f32 to vector<256x31xf32>
    %c0_31 = arith.constant 0 : index
    %c97 = arith.constant 97 : index
    %46 = vector.load %arg11[%c0_31, %c97] : memref<256x128xf32, #tpu.memory_space<vmem>>, vector<256x31xf32>
    tpu.vector_store %arg11[%c0_31, %c97], %45 {strides = array<i32>} : memref<256x128xf32, #tpu.memory_space<vmem>>, vector<256x31xf32>,
    return
  }
  func.func @transform_0(%arg0: i32) -> (i32, i32) {
    %c0_i32 = arith.constant 0 : i32
    %c0_i32_0 = arith.constant 0 : i32
    return %arg0, %c0_i32 : i32, i32
  }
  func.func @transform_1(%arg0: i32) -> (i32, i32) {
    %c0_i32 = arith.constant 0 : i32
    %c0_i32_0 = arith.constant 0 : i32
    return %arg0, %c0_i32 : i32, i32
  }
  func.func @transform_2(%arg0: i32) -> (i32, i32) {
    %c0_i32 = arith.constant 0 : i32
    %c0_i32_0 = arith.constant 0 : i32
    %c0_i32_1 = arith.constant 0 : i32
    return %c0_i32, %c0_i32_0 : i32, i32
  }
  func.func @transform_3(%arg0: i32) -> (i32, i32) {
    %c0_i32 = arith.constant 0 : i32
    %c0_i32_0 = arith.constant 0 : i32
    %c0_i32_1 = arith.constant 0 : i32
    return %c0_i32, %c0_i32_0 : i32, i32
  }
  func.func @transform_4(%arg0: i32) -> (i32, i32) {
    %c0_i32 = arith.constant 0 : i32
    %c0_i32_0 = arith.constant 0 : i32
    %c0_i32_1 = arith.constant 0 : i32
    return %c0_i32, %c0_i32_0 : i32, i32
  }
  func.func @transform_5(%arg0: i32) -> (i32, i32) {
    %c0_i32 = arith.constant 0 : i32
    %c0_i32_0 = arith.constant 0 : i32
    %c0_i32_1 = arith.constant 0 : i32
    return %c0_i32, %c0_i32_0 : i32, i32
  }
  func.func @transform_6(%arg0: i32) -> (i32, i32) {
    %c0_i32 = arith.constant 0 : i32
    %c0_i32_0 = arith.constant 0 : i32
    %c0_i32_1 = arith.constant 0 : i32
    return %c0_i32, %c0_i32_0 : i32, i32
  }
  func.func @transform_7(%arg0: i32) -> (i32, i32) {
    %c0_i32 = arith.constant 0 : i32
    %c0_i32_0 = arith.constant 0 : i32
    %c0_i32_1 = arith.constant 0 : i32
    return %c0_i32, %c0_i32_0 : i32, i32
  }
  func.func @transform_8(%arg0: i32) -> (i32, i32) {
    %c0_i32 = arith.constant 0 : i32
    %c0_i32_0 = arith.constant 0 : i32
    %c0_i32_1 = arith.constant 0 : i32
    return %c0_i32, %c0_i32_0 : i32, i32
  }
  func.func @transform_9(%arg0: i32) -> (i32, i32) {
    %c0_i32 = arith.constant 0 : i32
    %c0_i32_0 = arith.constant 0 : i32
    %c0_i32_1 = arith.constant 0 : i32
    return %c0_i32, %c0_i32_0 : i32, i32
  }
  func.func @transform_10(%arg0: i32) -> (i32, i32) {
    %c0_i32 = arith.constant 0 : i32
    %c0_i32_0 = arith.constant 0 : i32
    return %arg0, %c0_i32 : i32, i32
  }
}

</mosaic_0001>

<llo_original>
// kernel: tpu_custom_call.1
$region0: #{tpu_custom_call.1}
  #allocation0 [shape = 'u32[]', space=smem, size = 0x4, offset = 0x4, fixed_abs, tag = 'smem constant byte address 0x4 - core index']
  #allocation1 [shape = 'u32[144,128]{1,0:T(1,128)}', space=vmem, size = 0x12000, scoped, tag = 'internal scratch']
  %s0 = inlined_call_operand.vmem [shape: bf16[256,64], index: 0, kind: input, shape index: {}]
  %s1 = inlined_call_operand.vmem [shape: f32[256,16], index: 1, kind: input, shape index: {}]
  %s2 = inlined_call_operand.vmem [shape: bf16[64,32], index: 2, kind: input, shape index: {}]
  %s3 = inlined_call_operand.vmem [shape: f32[1,32], index: 3, kind: input, shape index: {}]
  %s4 = inlined_call_operand.vmem [shape: bf16[32,32], index: 4, kind: input, shape index: {}]
  %s5 = inlined_call_operand.vmem [shape: f32[1,32], index: 5, kind: input, shape index: {}]
  %s6 = inlined_call_operand.vmem [shape: bf16[16,33], index: 6, kind: input, shape index: {}]
  %s7 = inlined_call_operand.vmem [shape: f32[1,33], index: 7, kind: input, shape index: {}]
  %s8 = inlined_call_operand.vmem [shape: bf16[33,64], index: 8, kind: input, shape index: {}]
  %s9 = inlined_call_operand.vmem [shape: f32[1,64], index: 9, kind: input, shape index: {}]
  %s10 = inlined_call_operand.hbm [shape: f32[256,128], index: 10, kind: output, shape index: {}]
  %s11 = sld [smem:[#allocation0]]
  $region50: #{tpu_custom_call.1} parent=0
    _
  %s13 = ssub.s32 1, %s11
  %s14 = scalar_select 0, %s13, %s11
  $region1: #{tpu_custom_call.1} parent=0
    #allocation2 [shape = 'u8[131072]{0}', space=vmem, size = 0x20000, scoped, tag = 'output window, operand 0, single buffered']
    #allocation3 [shape = 's32[1]{0}', space=sflag, size = 0x4, scoped, tag = 'scoped memory for tpu_custom_call.1']
    %15 = vsyncpa [#allocation3], 0
    // Predicated region
    $region2: #{tpu_custom_call.1} parent=1 // pred_check
      _
    $region3: #{tpu_custom_call.1} parent=1 // pred_check_branch
      %17 = sbr.rel (0) target = $region5
    $region4: #{tpu_custom_call.1} parent=1 // pred_region
      _
    $region5: #{tpu_custom_call.1} parent=1 // pred_fallthru
      _
    // Predicated region
    $region6: #{tpu_custom_call.1} parent=1 // pred_check
      _
    $region7: #{tpu_custom_call.1} parent=1 // pred_check_branch
      %19 = sbr.rel (0) target = $region9
    $region8: #{tpu_custom_call.1} parent=1 // pred_region
      _
    $region9: #{tpu_custom_call.1} parent=1 // pred_fallthru
      _
    // Predicated region
    $region10: #{tpu_custom_call.1} parent=1 // pred_check
      _
    $region11: #{tpu_custom_call.1} parent=1 // pred_check_branch
      %21 = sbr.rel (0) target = $region13
    $region12: #{tpu_custom_call.1} parent=1 // pred_region
      _
    $region13: #{tpu_custom_call.1} parent=1 // pred_fallthru
      _
    // Predicated region
    $region14: #{tpu_custom_call.1} parent=1 // pred_check
      _
    $region15: #{tpu_custom_call.1} parent=1 // pred_check_branch
      %23 = sbr.rel (0) target = $region17
    $region16: #{tpu_custom_call.1} parent=1 // pred_region
      _
    $region17: #{tpu_custom_call.1} parent=1 // pred_fallthru
      _
    // Predicated region
    $region18: #{tpu_custom_call.1} parent=1 // pred_check
      _
    $region19: #{tpu_custom_call.1} parent=1 // pred_check_branch
      %25 = sbr.rel (0) target = $region21
    $region20: #{tpu_custom_call.1} parent=1 // pred_region
      _
    $region21: #{tpu_custom_call.1} parent=1 // pred_fallthru
      _
    // Predicated region
    $region22: #{tpu_custom_call.1} parent=1 // pred_check
      _
    $region23: #{tpu_custom_call.1} parent=1 // pred_check_branch
      %27 = sbr.rel (0) target = $region25
    $region24: #{tpu_custom_call.1} parent=1 // pred_region
      _
    $region25: #{tpu_custom_call.1} parent=1 // pred_fallthru
      _
    // Predicated region
    $region26: #{tpu_custom_call.1} parent=1 // pred_check
      _
    $region27: #{tpu_custom_call.1} parent=1 // pred_check_branch
      %29 = sbr.rel (0) target = $region29
    $region28: #{tpu_custom_call.1} parent=1 // pred_region
      _
    $region29: #{tpu_custom_call.1} parent=1 // pred_fallthru
      _
    // Predicated region
    $region30: #{tpu_custom_call.1} parent=1 // pred_check
      _
    $region31: #{tpu_custom_call.1} parent=1 // pred_check_branch
      %31 = sbr.rel (0) target = $region33
    $region32: #{tpu_custom_call.1} parent=1 // pred_region
      _
    $region33: #{tpu_custom_call.1} parent=1 // pred_fallthru
      _
    // Predicated region
    $region34: #{tpu_custom_call.1} parent=1 // pred_check
      _
    $region35: #{tpu_custom_call.1} parent=1 // pred_check_branch
      %33 = sbr.rel (0) target = $region37
    $region36: #{tpu_custom_call.1} parent=1 // pred_region
      _
    $region37: #{tpu_custom_call.1} parent=1 // pred_fallthru
      _
    // Predicated region
    $region38: #{tpu_custom_call.1} parent=1 // pred_check
      _
    $region39: #{tpu_custom_call.1} parent=1 // pred_check_branch
      %35 = sbr.rel (0) target = $region41
    $region40: #{tpu_custom_call.1} parent=1 // pred_region
      _
    $region41: #{tpu_custom_call.1} parent=1 // pred_fallthru
      _
    %v37 = vld [vmem:[%s0] sm:$0xf]
    %v38 = vld [vmem:[%s0 + $0x4] sm:$0xf]
    %v39 = vld [vmem:[%s0 + $0x8] sm:$0xf]
    %v40 = vld [vmem:[%s0 + $0xc] sm:$0xf]
    %v41 = vld [vmem:[%s0 + $0x10] sm:$0xf]
    %v42 = vld [vmem:[%s0 + $0x14] sm:$0xf]
    %v43 = vld [vmem:[%s0 + $0x18] sm:$0xf]
    %v44 = vld [vmem:[%s0 + $0x1c] sm:$0xf]
    %v45 = vld [vmem:[%s0 + $0x20] sm:$0xf]
    %v46 = vld [vmem:[%s0 + $0x24] sm:$0xf]
    %v47 = vld [vmem:[%s0 + $0x28] sm:$0xf]
    %v48 = vld [vmem:[%s0 + $0x2c] sm:$0xf]
    %v49 = vld [vmem:[%s0 + $0x30] sm:$0xf]
    %v50 = vld [vmem:[%s0 + $0x34] sm:$0xf]
    %v51 = vld [vmem:[%s0 + $0x38] sm:$0xf]
    %v52 = vld [vmem:[%s0 + $0x3c] sm:$0xf]
    %v53 = vld [vmem:[%s0 + $0x40] sm:$0xf]
    %v54 = vld [vmem:[%s0 + $0x44] sm:$0xf]
    %v55 = vld [vmem:[%s0 + $0x48] sm:$0xf]
    %v56 = vld [vmem:[%s0 + $0x4c] sm:$0xf]
    %v57 = vld [vmem:[%s0 + $0x50] sm:$0xf]
    %v58 = vld [vmem:[%s0 + $0x54] sm:$0xf]
    %v59 = vld [vmem:[%s0 + $0x58] sm:$0xf]
    %v60 = vld [vmem:[%s0 + $0x5c] sm:$0xf]
    %v61 = vld [vmem:[%s0 + $0x60] sm:$0xf]
    %v62 = vld [vmem:[%s0 + $0x64] sm:$0xf]
    %v63 = vld [vmem:[%s0 + $0x68] sm:$0xf]
    %v64 = vld [vmem:[%s0 + $0x6c] sm:$0xf]
    %v65 = vld [vmem:[%s0 + $0x70] sm:$0xf]
    %v66 = vld [vmem:[%s0 + $0x74] sm:$0xf]
    %v67 = vld [vmem:[%s0 + $0x78] sm:$0xf]
    %v68 = vld [vmem:[%s0 + $0x7c] sm:$0xf]
    %v69 = vld [vmem:[%s1] sm:$0xff]
    %v70 = vld [vmem:[%s1 + $0x8] sm:$0xff]
    %v71 = vld [vmem:[%s1 + $0x10] sm:$0xff]
    %v72 = vld [vmem:[%s1 + $0x18] sm:$0xff]
    %v73 = vld [vmem:[%s1 + $0x20] sm:$0xff]
    %v74 = vld [vmem:[%s1 + $0x28] sm:$0xff]
    %v75 = vld [vmem:[%s1 + $0x30] sm:$0xff]
    %v76 = vld [vmem:[%s1 + $0x38] sm:$0xff]
    %v77 = vld [vmem:[%s1 + $0x40] sm:$0xff]
    %v78 = vld [vmem:[%s1 + $0x48] sm:$0xff]
    %v79 = vld [vmem:[%s1 + $0x50] sm:$0xff]
    %v80 = vld [vmem:[%s1 + $0x58] sm:$0xff]
    %v81 = vld [vmem:[%s1 + $0x60] sm:$0xff]
    %v82 = vld [vmem:[%s1 + $0x68] sm:$0xff]
    %v83 = vld [vmem:[%s1 + $0x70] sm:$0xff]
    %v84 = vld [vmem:[%s1 + $0x78] sm:$0xff]
    %v85 = vld [vmem:[%s1 + $0x80] sm:$0xff]
    %v86 = vld [vmem:[%s1 + $0x88] sm:$0xff]
    %v87 = vld [vmem:[%s1 + $0x90] sm:$0xff]
    %v88 = vld [vmem:[%s1 + $0x98] sm:$0xff]
    %v89 = vld [vmem:[%s1 + $0xa0] sm:$0xff]
    %v90 = vld [vmem:[%s1 + $0xa8] sm:$0xff]
    %v91 = vld [vmem:[%s1 + $0xb0] sm:$0xff]
    %v92 = vld [vmem:[%s1 + $0xb8] sm:$0xff]
    %v93 = vld [vmem:[%s1 + $0xc0] sm:$0xff]
    %v94 = vld [vmem:[%s1 + $0xc8] sm:$0xff]
    %v95 = vld [vmem:[%s1 + $0xd0] sm:$0xff]
    %v96 = vld [vmem:[%s1 + $0xd8] sm:$0xff]
    %v97 = vld [vmem:[%s1 + $0xe0] sm:$0xff]
    %v98 = vld [vmem:[%s1 + $0xe8] sm:$0xff]
    %v99 = vld [vmem:[%s1 + $0xf0] sm:$0xff]
    %v100 = vld [vmem:[%s1 + $0xf8] sm:$0xff]
    %v101 = vld [vmem:[%s2] sm:$0xf]
    %v102 = vld [vmem:[%s2 + $0x4] sm:$0xf]
    %v103 = vld [vmem:[%s2 + $0x8] sm:$0xf]
    %v104 = vld [vmem:[%s2 + $0xc] sm:$0xf]
    %v105 = vld [vmem:[%s2 + $0x10] sm:$0xf]
    %v106 = vld [vmem:[%s2 + $0x14] sm:$0xf]
    %v107 = vld [vmem:[%s2 + $0x18] sm:$0xf]
    %v108 = vld [vmem:[%s2 + $0x1c] sm:$0xf]
    %v109 = vld [vmem:[%s3] sm:$0x1]
    %v111 = vlaneseq
    %v112 = vshrl.u32 %v111, 7
    %v113 = vsub.s32 0, %v112
    %v114 = vrot.slane %v109, %v113
    %v148 = vunpack.c.l.b16 %v37
    %v149 = vunpack.c.l.b16 %v38
    %v150 = vunpack.c.l.b16 %v39
    %v151 = vunpack.c.l.b16 %v40
    %v152 = vunpack.c.l.b16 %v41
    %v153 = vunpack.c.l.b16 %v42
    %v154 = vunpack.c.l.b16 %v43
    %v155 = vunpack.c.l.b16 %v44
    %v156 = vunpack.c.l.b16 %v45
    %v157 = vunpack.c.l.b16 %v46
    %v158 = vunpack.c.l.b16 %v47
    %v159 = vunpack.c.l.b16 %v48
    %v160 = vunpack.c.l.b16 %v49
    %v161 = vunpack.c.l.b16 %v50
    %v162 = vunpack.c.l.b16 %v51
    %v163 = vunpack.c.l.b16 %v52
    %v164 = vunpack.c.l.b16 %v53
    %v165 = vunpack.c.l.b16 %v54
    %v166 = vunpack.c.l.b16 %v55
    %v167 = vunpack.c.l.b16 %v56
    %v168 = vunpack.c.l.b16 %v57
    %v169 = vunpack.c.l.b16 %v58
    %v170 = vunpack.c.l.b16 %v59
    %v171 = vunpack.c.l.b16 %v60
    %v172 = vunpack.c.l.b16 %v61
    %v173 = vunpack.c.l.b16 %v62
    %v174 = vunpack.c.l.b16 %v63
    %v175 = vunpack.c.l.b16 %v64
    %v176 = vunpack.c.l.b16 %v65
    %v177 = vunpack.c.l.b16 %v66
    %v178 = vunpack.c.l.b16 %v67
    %v179 = vunpack.c.l.b16 %v68
    %v180 = vpack.c.b16 %v149, %v148
    %v181 = vpack.c.b16 %v151, %v150
    %v182 = vpack.c.b16 %v153, %v152
    %v183 = vpack.c.b16 %v155, %v154
    %v184 = vpack.c.b16 %v157, %v156
    %v185 = vpack.c.b16 %v159, %v158
    %v186 = vpack.c.b16 %v161, %v160
    %v187 = vpack.c.b16 %v163, %v162
    %v188 = vpack.c.b16 %v165, %v164
    %v189 = vpack.c.b16 %v167, %v166
    %v190 = vpack.c.b16 %v169, %v168
    %v191 = vpack.c.b16 %v171, %v170
    %v192 = vpack.c.b16 %v173, %v172
    %v193 = vpack.c.b16 %v175, %v174
    %v194 = vpack.c.b16 %v177, %v176
    %v195 = vpack.c.b16 %v179, %v178
    %v204 = vunpack.c.l.b16 %v101
    %v205 = vunpack.c.l.b16 %v102
    %v206 = vunpack.c.l.b16 %v103
    %v207 = vunpack.c.l.b16 %v104
    %v208 = vunpack.c.l.b16 %v105
    %v209 = vunpack.c.l.b16 %v106
    %v210 = vunpack.c.l.b16 %v107
    %v211 = vunpack.c.l.b16 %v108
    %v212 = vpack.c.b16 %v205, %v204
    %v213 = vpack.c.b16 %v207, %v206
    %v214 = vpack.c.b16 %v209, %v208
    %v215 = vpack.c.b16 %v211, %v210
    %vm220 = vcmask 523264
    %v222 = vsel %vm220, %v180, 0
    %v225 = vsel %vm220, %v181, 0
    %v228 = vsel %vm220, %v182, 0
    %v231 = vsel %vm220, %v183, 0
    %v234 = vsel %vm220, %v184, 0
    %v237 = vsel %vm220, %v185, 0
    %v240 = vsel %vm220, %v186, 0
    %v243 = vsel %vm220, %v187, 0
    %v246 = vsel %vm220, %v188, 0
    %v249 = vsel %vm220, %v189, 0
    %v252 = vsel %vm220, %v190, 0
    %v255 = vsel %vm220, %v191, 0
    %v258 = vsel %vm220, %v192, 0
    %v261 = vsel %vm220, %v193, 0
    %v264 = vsel %vm220, %v194, 0
    %v267 = vsel %vm220, %v195, 0
    %269 = vmatprep.subr.bf16.mxu0 0
    %270 = vmatpush1.bf16.msra.mxu0 0
    %271 = vmatprep.subr.bf16.mxu0 0
    %272 = vmatpush1.bf16.msra.mxu0 0
    %273 = vmatprep.subr.bf16.mxu0 0
    %274 = vmatpush1.bf16.msra.mxu0 0
    %275 = vmatprep.subr.bf16.mxu0 0
    %276 = vmatpush1.bf16.msra.mxu0 0
    %277 = vmatprep.subr.bf16.mxu0 0
    %278 = vmatpush1.bf16.msra.mxu0 %v215
    %279 = vmatprep.subr.bf16.mxu0 0
    %280 = vmatpush1.bf16.msra.mxu0 %v214
    %281 = vmatprep.subr.bf16.mxu0 0
    %282 = vmatpush1.bf16.msra.mxu0 %v213
    %283 = vmatprep.subr.bf16.mxu0 0
    %284 = vmatpush1.bf16.msra.mxu0 %v212
    %285 = vmatprep.subr.bf16.mxu0 0
    %286 = vmatpush2.bf16.msra.mxu0 0
    %287 = vmatprep.subr.bf16.mxu0 0
    %288 = vmatpush2.bf16.msra.mxu0 0
    %289 = vmatprep.subr.bf16.mxu0 0
    %290 = vmatpush2.bf16.msra.mxu0 0
    %291 = vmatprep.subr.bf16.mxu0 0
    %292 = vmatpush2.bf16.msra.mxu0 0
    %293 = vmatprep.subr.bf16.mxu0 0
    %294 = vmatpush2.bf16.msra.mxu0 0
    %295 = vmatprep.subr.bf16.mxu0 0
    %296 = vmatpush2.bf16.msra.mxu0 0
    %297 = vmatprep.subr.bf16.mxu0 0
    %298 = vmatpush2.bf16.msra.mxu0 0
    %299 = vmatprep.subr.bf16.mxu0 0
    %300 = vmatpush2.bf16.msra.mxu0 0
    %301 = vmatprep.mubr.bf16.mxu0 0
    %302 = vmatmul.mubr.bf16.gmra.mxu0 %v222
    %v303 = vpop.f32.mrf.mxu0
    %v304 = vadd.f32 %v114, %v303
    %v305 = vpop.f32.mrf.mxu0
    %v306 = vpop.f32.mrf.mxu0
    %v307 = vadd.f32 %v114, %v306
    %v308 = vpop.f32.mrf.mxu0
    %309 = vmatprep.mubr.bf16.mxu0 0
    %310 = vmatmul.mubr.bf16.gmra.mxu0 %v225
    %v311 = vpop.f32.mrf.mxu0
    %v312 = vadd.f32 %v114, %v311
    %v313 = vpop.f32.mrf.mxu0
    %v314 = vpop.f32.mrf.mxu0
    %v315 = vadd.f32 %v114, %v314
    %v316 = vpop.f32.mrf.mxu0
    %317 = vmatprep.mubr.bf16.mxu0 0
    %318 = vmatmul.mubr.bf16.gmra.mxu0 %v228
    %v319 = vpop.f32.mrf.mxu0
    %v320 = vadd.f32 %v114, %v319
    %v321 = vpop.f32.mrf.mxu0
    %v322 = vpop.f32.mrf.mxu0
    %v323 = vadd.f32 %v114, %v322
    %v324 = vpop.f32.mrf.mxu0
    %325 = vmatprep.mubr.bf16.mxu0 0
    %326 = vmatmul.mubr.bf16.gmra.mxu0 %v231
    %v327 = vpop.f32.mrf.mxu0
    %v328 = vadd.f32 %v114, %v327
    %v329 = vpop.f32.mrf.mxu0
    %v330 = vpop.f32.mrf.mxu0
    %v331 = vadd.f32 %v114, %v330
    %v332 = vpop.f32.mrf.mxu0
    %333 = vmatprep.mubr.bf16.mxu0 0
    %334 = vmatmul.mubr.bf16.gmra.mxu0 %v234
    %v335 = vpop.f32.mrf.mxu0
    %v336 = vadd.f32 %v114, %v335
    %v337 = vpop.f32.mrf.mxu0
    %v338 = vpop.f32.mrf.mxu0
    %v339 = vadd.f32 %v114, %v338
    %v340 = vpop.f32.mrf.mxu0
    %341 = vmatprep.mubr.bf16.mxu0 0
    %342 = vmatmul.mubr.bf16.gmra.mxu0 %v237
    %v343 = vpop.f32.mrf.mxu0
    %v344 = vadd.f32 %v114, %v343
    %v345 = vpop.f32.mrf.mxu0
    %v346 = vpop.f32.mrf.mxu0
    %v347 = vadd.f32 %v114, %v346
    %v348 = vpop.f32.mrf.mxu0
    %349 = vmatprep.mubr.bf16.mxu0 0
    %350 = vmatmul.mubr.bf16.gmra.mxu0 %v240
    %v351 = vpop.f32.mrf.mxu0
    %v352 = vadd.f32 %v114, %v351
    %v353 = vpop.f32.mrf.mxu0
    %v354 = vpop.f32.mrf.mxu0
    %v355 = vadd.f32 %v114, %v354
    %v356 = vpop.f32.mrf.mxu0
    %357 = vmatprep.mubr.bf16.mxu0 0
    %358 = vmatmul.mubr.bf16.gmra.mxu0 %v243
    %v359 = vpop.f32.mrf.mxu0
    %v360 = vadd.f32 %v114, %v359
    %v361 = vpop.f32.mrf.mxu0
    %v362 = vpop.f32.mrf.mxu0
    %v363 = vadd.f32 %v114, %v362
    %v364 = vpop.f32.mrf.mxu0
    %365 = vmatprep.mubr.bf16.mxu0 0
    %366 = vmatmul.mubr.bf16.gmra.mxu0 %v246
    %v367 = vpop.f32.mrf.mxu0
    %v368 = vadd.f32 %v114, %v367
    %v369 = vpop.f32.mrf.mxu0
    %v370 = vpop.f32.mrf.mxu0
    %v371 = vadd.f32 %v114, %v370
    %v372 = vpop.f32.mrf.mxu0
    %373 = vmatprep.mubr.bf16.mxu0 0
    %374 = vmatmul.mubr.bf16.gmra.mxu0 %v249
    %v375 = vpop.f32.mrf.mxu0
    %v376 = vadd.f32 %v114, %v375
    %v377 = vpop.f32.mrf.mxu0
    %v378 = vpop.f32.mrf.mxu0
    %v379 = vadd.f32 %v114, %v378
    %v380 = vpop.f32.mrf.mxu0
    %381 = vmatprep.mubr.bf16.mxu0 0
    %382 = vmatmul.mubr.bf16.gmra.mxu0 %v252
    %v383 = vpop.f32.mrf.mxu0
    %v384 = vadd.f32 %v114, %v383
    %v385 = vpop.f32.mrf.mxu0
    %v386 = vpop.f32.mrf.mxu0
    %v387 = vadd.f32 %v114, %v386
    %v388 = vpop.f32.mrf.mxu0
    %389 = vmatprep.mubr.bf16.mxu0 0
    %390 = vmatmul.mubr.bf16.gmra.mxu0 %v255
    %v391 = vpop.f32.mrf.mxu0
    %v392 = vadd.f32 %v114, %v391
    %v393 = vpop.f32.mrf.mxu0
    %v394 = vpop.f32.mrf.mxu0
    %v395 = vadd.f32 %v114, %v394
    %v396 = vpop.f32.mrf.mxu0
    %397 = vmatprep.mubr.bf16.mxu0 0
    %398 = vmatmul.mubr.bf16.gmra.mxu0 %v258
    %v399 = vpop.f32.mrf.mxu0
    %v400 = vadd.f32 %v114, %v399
    %v401 = vpop.f32.mrf.mxu0
    %v402 = vpop.f32.mrf.mxu0
    %v403 = vadd.f32 %v114, %v402
    %v404 = vpop.f32.mrf.mxu0
    %405 = vmatprep.mubr.bf16.mxu0 0
    %406 = vmatmul.mubr.bf16.gmra.mxu0 %v261
    %v407 = vpop.f32.mrf.mxu0
    %v408 = vadd.f32 %v114, %v407
    %v409 = vpop.f32.mrf.mxu0
    %v410 = vpop.f32.mrf.mxu0
    %v411 = vadd.f32 %v114, %v410
    %v412 = vpop.f32.mrf.mxu0
    %413 = vmatprep.mubr.bf16.mxu0 0
    %414 = vmatmul.mubr.bf16.gmra.mxu0 %v264
    %v415 = vpop.f32.mrf.mxu0
    %v416 = vadd.f32 %v114, %v415
    %v417 = vpop.f32.mrf.mxu0
    %v418 = vpop.f32.mrf.mxu0
    %v419 = vadd.f32 %v114, %v418
    %v420 = vpop.f32.mrf.mxu0
    %421 = vmatprep.mubr.bf16.mxu0 0
    %422 = vmatmul.mubr.bf16.gmra.mxu0 %v267
    %v423 = vpop.f32.mrf.mxu0
    %v424 = vadd.f32 %v114, %v423
    %v425 = vpop.f32.mrf.mxu0
    %v426 = vpop.f32.mrf.mxu0
    %v427 = vadd.f32 %v114, %v426
    %v428 = vpop.f32.mrf.mxu0
    %429 = vdwg.mxu0
    %v430 = vmax.f32 %v304, 0.0
    %v431 = vmax.f32 %v307, 0.0
    %v432 = vmax.f32 %v312, 0.0
    %v433 = vmax.f32 %v315, 0.0
    %v434 = vmax.f32 %v320, 0.0
    %v435 = vmax.f32 %v323, 0.0
    %v436 = vmax.f32 %v328, 0.0
    %v437 = vmax.f32 %v331, 0.0
    %v438 = vmax.f32 %v336, 0.0
    %v439 = vmax.f32 %v339, 0.0
    %v440 = vmax.f32 %v344, 0.0
    %v441 = vmax.f32 %v347, 0.0
    %v442 = vmax.f32 %v352, 0.0
    %v443 = vmax.f32 %v355, 0.0
    %v444 = vmax.f32 %v360, 0.0
    %v445 = vmax.f32 %v363, 0.0
    %v446 = vmax.f32 %v368, 0.0
    %v447 = vmax.f32 %v371, 0.0
    %v448 = vmax.f32 %v376, 0.0
    %v449 = vmax.f32 %v379, 0.0
    %v450 = vmax.f32 %v384, 0.0
    %v451 = vmax.f32 %v387, 0.0
    %v452 = vmax.f32 %v392, 0.0
    %v453 = vmax.f32 %v395, 0.0
    %v454 = vmax.f32 %v400, 0.0
    %v455 = vmax.f32 %v403, 0.0
    %v456 = vmax.f32 %v408, 0.0
    %v457 = vmax.f32 %v411, 0.0
    %v458 = vmax.f32 %v416, 0.0
    %v459 = vmax.f32 %v419, 0.0
    %v460 = vmax.f32 %v424, 0.0
    %v461 = vmax.f32 %v427, 0.0
    %v462 = vpack.c.bf16 %v431, %v430
    %v463 = vpack.c.bf16 %v433, %v432
    %v464 = vpack.c.bf16 %v435, %v434
    %v465 = vpack.c.bf16 %v437, %v436
    %v466 = vpack.c.bf16 %v439, %v438
    %v467 = vpack.c.bf16 %v441, %v440
    %v468 = vpack.c.bf16 %v443, %v442
    %v469 = vpack.c.bf16 %v445, %v444
    %v470 = vpack.c.bf16 %v447, %v446
    %v471 = vpack.c.bf16 %v449, %v448
    %v472 = vpack.c.bf16 %v451, %v450
    %v473 = vpack.c.bf16 %v453, %v452
    %v474 = vpack.c.bf16 %v455, %v454
    %v475 = vpack.c.bf16 %v457, %v456
    %v476 = vpack.c.bf16 %v459, %v458
    %v477 = vpack.c.bf16 %v461, %v460
    %v478 = vld [vmem:[%s4] sm:$0xf]
    %v479 = vld [vmem:[%s4 + $0x4] sm:$0xf]
    %v480 = vld [vmem:[%s4 + $0x8] sm:$0xf]
    %v481 = vld [vmem:[%s4 + $0xc] sm:$0xf]
    %v482 = vld [vmem:[%s5] sm:$0x1]
    %v484 = vlaneseq
    %v485 = vshrl.u32 %v484, 7
    %v486 = vsub.s32 0, %v485
    %v487 = vrot.slane %v482, %v486
    %v493 = vunpack.c.l.b16 %v478
    %v494 = vunpack.c.l.b16 %v479
    %v495 = vunpack.c.l.b16 %v480
    %v496 = vunpack.c.l.b16 %v481
    %v497 = vpack.c.b16 %v494, %v493
    %v498 = vpack.c.b16 %v496, %v495
    %vm501 = vcmask 261120
    %v503 = vsel %vm501, %v462, 0
    %v506 = vsel %vm501, %v463, 0
    %v509 = vsel %vm501, %v464, 0
    %v512 = vsel %vm501, %v465, 0
    %v515 = vsel %vm501, %v466, 0
    %v518 = vsel %vm501, %v467, 0
    %v521 = vsel %vm501, %v468, 0
    %v524 = vsel %vm501, %v469, 0
    %v527 = vsel %vm501, %v470, 0
    %v530 = vsel %vm501, %v471, 0
    %v533 = vsel %vm501, %v472, 0
    %v536 = vsel %vm501, %v473, 0
    %v539 = vsel %vm501, %v474, 0
    %v542 = vsel %vm501, %v475, 0
    %v545 = vsel %vm501, %v476, 0
    %v548 = vsel %vm501, %v477, 0
    %550 = vmatprep.subr.bf16.mxu0 0
    %551 = vmatpush1.bf16.msra.mxu0 0
    %552 = vmatprep.subr.bf16.mxu0 0
    %553 = vmatpush1.bf16.msra.mxu0 0
    %554 = vmatprep.subr.bf16.mxu0 0
    %555 = vmatpush1.bf16.msra.mxu0 0
    %556 = vmatprep.subr.bf16.mxu0 0
    %557 = vmatpush1.bf16.msra.mxu0 0
    %558 = vmatprep.subr.bf16.mxu0 0
    %559 = vmatpush1.bf16.msra.mxu0 0
    %560 = vmatprep.subr.bf16.mxu0 0
    %561 = vmatpush1.bf16.msra.mxu0 0
    %562 = vmatprep.subr.bf16.mxu0 0
    %563 = vmatpush1.bf16.msra.mxu0 %v498
    %564 = vmatprep.subr.bf16.mxu0 0
    %565 = vmatpush1.bf16.msra.mxu0 %v497
    %566 = vmatprep.subr.bf16.mxu0 0
    %567 = vmatpush2.bf16.msra.mxu0 0
    %568 = vmatprep.subr.bf16.mxu0 0
    %569 = vmatpush2.bf16.msra.mxu0 0
    %570 = vmatprep.subr.bf16.mxu0 0
    %571 = vmatpush2.bf16.msra.mxu0 0
    %572 = vmatprep.subr.bf16.mxu0 0
    %573 = vmatpush2.bf16.msra.mxu0 0
    %574 = vmatprep.subr.bf16.mxu0 0
    %575 = vmatpush2.bf16.msra.mxu0 0
    %576 = vmatprep.subr.bf16.mxu0 0
    %577 = vmatpush2.bf16.msra.mxu0 0
    %578 = vmatprep.subr.bf16.mxu0 0
    %579 = vmatpush2.bf16.msra.mxu0 0
    %580 = vmatprep.subr.bf16.mxu0 0
    %581 = vmatpush2.bf16.msra.mxu0 0
    %582 = vmatprep.mubr.bf16.mxu0 0
    %583 = vmatmul.mubr.bf16.gmra.mxu0 %v503
    %v584 = vpop.f32.mrf.mxu0
    %v585 = vadd.f32 %v487, %v584
    %v586 = vpop.f32.mrf.mxu0
    %v587 = vpop.f32.mrf.mxu0
    %v588 = vadd.f32 %v487, %v587
    %v589 = vpop.f32.mrf.mxu0
    %590 = vmatprep.mubr.bf16.mxu0 0
    %591 = vmatmul.mubr.bf16.gmra.mxu0 %v506
    %v592 = vpop.f32.mrf.mxu0
    %v593 = vadd.f32 %v487, %v592
    %v594 = vpop.f32.mrf.mxu0
    %v595 = vpop.f32.mrf.mxu0
    %v596 = vadd.f32 %v487, %v595
    %v597 = vpop.f32.mrf.mxu0
    %598 = vmatprep.mubr.bf16.mxu0 0
    %599 = vmatmul.mubr.bf16.gmra.mxu0 %v509
    %v600 = vpop.f32.mrf.mxu0
    %v601 = vadd.f32 %v487, %v600
    %v602 = vpop.f32.mrf.mxu0
    %v603 = vpop.f32.mrf.mxu0
    %v604 = vadd.f32 %v487, %v603
    %v605 = vpop.f32.mrf.mxu0
    %606 = vmatprep.mubr.bf16.mxu0 0
    %607 = vmatmul.mubr.bf16.gmra.mxu0 %v512
    %v608 = vpop.f32.mrf.mxu0
    %v609 = vadd.f32 %v487, %v608
    %v610 = vpop.f32.mrf.mxu0
    %v611 = vpop.f32.mrf.mxu0
    %v612 = vadd.f32 %v487, %v611
    %v613 = vpop.f32.mrf.mxu0
    %614 = vmatprep.mubr.bf16.mxu0 0
    %615 = vmatmul.mubr.bf16.gmra.mxu0 %v515
    %v616 = vpop.f32.mrf.mxu0
    %v617 = vadd.f32 %v487, %v616
    %v618 = vpop.f32.mrf.mxu0
    %v619 = vpop.f32.mrf.mxu0
    %v620 = vadd.f32 %v487, %v619
    %v621 = vpop.f32.mrf.mxu0
    %622 = vmatprep.mubr.bf16.mxu0 0
    %623 = vmatmul.mubr.bf16.gmra.mxu0 %v518
    %v624 = vpop.f32.mrf.mxu0
    %v625 = vadd.f32 %v487, %v624
    %v626 = vpop.f32.mrf.mxu0
    %v627 = vpop.f32.mrf.mxu0
    %v628 = vadd.f32 %v487, %v627
    %v629 = vpop.f32.mrf.mxu0
    %630 = vmatprep.mubr.bf16.mxu0 0
    %631 = vmatmul.mubr.bf16.gmra.mxu0 %v521
    %v632 = vpop.f32.mrf.mxu0
    %v633 = vadd.f32 %v487, %v632
    %v634 = vpop.f32.mrf.mxu0
    %v635 = vpop.f32.mrf.mxu0
    %v636 = vadd.f32 %v487, %v635
    %v637 = vpop.f32.mrf.mxu0
    %638 = vmatprep.mubr.bf16.mxu0 0
    %639 = vmatmul.mubr.bf16.gmra.mxu0 %v524
    %v640 = vpop.f32.mrf.mxu0
    %v641 = vadd.f32 %v487, %v640
    %v642 = vpop.f32.mrf.mxu0
    %v643 = vpop.f32.mrf.mxu0
    %v644 = vadd.f32 %v487, %v643
    %v645 = vpop.f32.mrf.mxu0
    %646 = vmatprep.mubr.bf16.mxu0 0
    %647 = vmatmul.mubr.bf16.gmra.mxu0 %v527
    %v648 = vpop.f32.mrf.mxu0
    %v649 = vadd.f32 %v487, %v648
    %v650 = vpop.f32.mrf.mxu0
    %v651 = vpop.f32.mrf.mxu0
    %v652 = vadd.f32 %v487, %v651
    %v653 = vpop.f32.mrf.mxu0
    %654 = vmatprep.mubr.bf16.mxu0 0
    %655 = vmatmul.mubr.bf16.gmra.mxu0 %v530
    %v656 = vpop.f32.mrf.mxu0
    %v657 = vadd.f32 %v487, %v656
    %v658 = vpop.f32.mrf.mxu0
    %v659 = vpop.f32.mrf.mxu0
    %v660 = vadd.f32 %v487, %v659
    %v661 = vpop.f32.mrf.mxu0
    %662 = vmatprep.mubr.bf16.mxu0 0
    %663 = vmatmul.mubr.bf16.gmra.mxu0 %v533
    %v664 = vpop.f32.mrf.mxu0
    %v665 = vadd.f32 %v487, %v664
    %v666 = vpop.f32.mrf.mxu0
    %v667 = vpop.f32.mrf.mxu0
    %v668 = vadd.f32 %v487, %v667
    %v669 = vpop.f32.mrf.mxu0
    %670 = vmatprep.mubr.bf16.mxu0 0
    %671 = vmatmul.mubr.bf16.gmra.mxu0 %v536
    %v672 = vpop.f32.mrf.mxu0
    %v673 = vadd.f32 %v487, %v672
    %v674 = vpop.f32.mrf.mxu0
    %v675 = vpop.f32.mrf.mxu0
    %v676 = vadd.f32 %v487, %v675
    %v677 = vpop.f32.mrf.mxu0
    %678 = vmatprep.mubr.bf16.mxu0 0
    %679 = vmatmul.mubr.bf16.gmra.mxu0 %v539
    %v680 = vpop.f32.mrf.mxu0
    %v681 = vadd.f32 %v487, %v680
    %v682 = vpop.f32.mrf.mxu0
    %v683 = vpop.f32.mrf.mxu0
    %v684 = vadd.f32 %v487, %v683
    %v685 = vpop.f32.mrf.mxu0
    %686 = vmatprep.mubr.bf16.mxu0 0
    %687 = vmatmul.mubr.bf16.gmra.mxu0 %v542
    %v688 = vpop.f32.mrf.mxu0
    %v689 = vadd.f32 %v487, %v688
    %v690 = vpop.f32.mrf.mxu0
    %v691 = vpop.f32.mrf.mxu0
    %v692 = vadd.f32 %v487, %v691
    %v693 = vpop.f32.mrf.mxu0
    %694 = vmatprep.mubr.bf16.mxu0 0
    %695 = vmatmul.mubr.bf16.gmra.mxu0 %v545
    %v696 = vpop.f32.mrf.mxu0
    %v697 = vadd.f32 %v487, %v696
    %v698 = vpop.f32.mrf.mxu0
    %v699 = vpop.f32.mrf.mxu0
    %v700 = vadd.f32 %v487, %v699
    %v701 = vpop.f32.mrf.mxu0
    %702 = vmatprep.mubr.bf16.mxu0 0
    %703 = vmatmul.mubr.bf16.gmra.mxu0 %v548
    %v704 = vpop.f32.mrf.mxu0
    %v705 = vadd.f32 %v487, %v704
    %v706 = vpop.f32.mrf.mxu0
    %v707 = vpop.f32.mrf.mxu0
    %v708 = vadd.f32 %v487, %v707
    %v709 = vpop.f32.mrf.mxu0
    %710 = vdwg.mxu0
    %v711 = vmul.f32 %v585, 0.5
    %v712 = vmul.f32 %v588, 0.5
    %v713 = vmul.f32 %v593, 0.5
    %v714 = vmul.f32 %v596, 0.5
    %v715 = vmul.f32 %v601, 0.5
    %v716 = vmul.f32 %v604, 0.5
    %v717 = vmul.f32 %v609, 0.5
    %v718 = vmul.f32 %v612, 0.5
    %v719 = vmul.f32 %v617, 0.5
    %v720 = vmul.f32 %v620, 0.5
    %v721 = vmul.f32 %v625, 0.5
    %v722 = vmul.f32 %v628, 0.5
    %v723 = vmul.f32 %v633, 0.5
    %v724 = vmul.f32 %v636, 0.5
    %v725 = vmul.f32 %v641, 0.5
    %v726 = vmul.f32 %v644, 0.5
    %v727 = vmul.f32 %v649, 0.5
    %v728 = vmul.f32 %v652, 0.5
    %v729 = vmul.f32 %v657, 0.5
    %v730 = vmul.f32 %v660, 0.5
    %v731 = vmul.f32 %v665, 0.5
    %v732 = vmul.f32 %v668, 0.5
    %v733 = vmul.f32 %v673, 0.5
    %v734 = vmul.f32 %v676, 0.5
    %v735 = vmul.f32 %v681, 0.5
    %v736 = vmul.f32 %v684, 0.5
    %v737 = vmul.f32 %v689, 0.5
    %v738 = vmul.f32 %v692, 0.5
    %v739 = vmul.f32 %v697, 0.5
    %v740 = vmul.f32 %v700, 0.5
    %v741 = vmul.f32 %v705, 0.5
    %v742 = vmul.f32 %v708, 0.5
    %v743 = vmul.f32 %v711, 1.442695
    %v744 = vpow.pop %v743
    %v745 = vmul.f32 %v712, 1.442695
    %v746 = vpow.pop %v745
    %v747 = vmul.f32 %v713, 1.442695
    %v748 = vpow.pop %v747
    %v749 = vmul.f32 %v714, 1.442695
    %v750 = vpow.pop %v749
    %v751 = vmul.f32 %v715, 1.442695
    %v752 = vpow.pop %v751
    %v753 = vmul.f32 %v716, 1.442695
    %v754 = vpow.pop %v753
    %v755 = vmul.f32 %v717, 1.442695
    %v756 = vpow.pop %v755
    %v757 = vmul.f32 %v718, 1.442695
    %v758 = vpow.pop %v757
    %v759 = vmul.f32 %v719, 1.442695
    %v760 = vpow.pop %v759
    %v761 = vmul.f32 %v720, 1.442695
    %v762 = vpow.pop %v761
    %v763 = vmul.f32 %v721, 1.442695
    %v764 = vpow.pop %v763
    %v765 = vmul.f32 %v722, 1.442695
    %v766 = vpow.pop %v765
    %v767 = vmul.f32 %v723, 1.442695
    %v768 = vpow.pop %v767
    %v769 = vmul.f32 %v724, 1.442695
    %v770 = vpow.pop %v769
    %v771 = vmul.f32 %v725, 1.442695
    %v772 = vpow.pop %v771
    %v773 = vmul.f32 %v726, 1.442695
    %v774 = vpow.pop %v773
    %v775 = vmul.f32 %v727, 1.442695
    %v776 = vpow.pop %v775
    %v777 = vmul.f32 %v728, 1.442695
    %v778 = vpow.pop %v777
    %v779 = vmul.f32 %v729, 1.442695
    %v780 = vpow.pop %v779
    %v781 = vmul.f32 %v730, 1.442695
    %v782 = vpow.pop %v781
    %v783 = vmul.f32 %v731, 1.442695
    %v784 = vpow.pop %v783
    %v785 = vmul.f32 %v732, 1.442695
    %v786 = vpow.pop %v785
    %v787 = vmul.f32 %v733, 1.442695
    %v788 = vpow.pop %v787
    %v789 = vmul.f32 %v734, 1.442695
    %v790 = vpow.pop %v789
    %v791 = vmul.f32 %v735, 1.442695
    %v792 = vpow.pop %v791
    %v793 = vmul.f32 %v736, 1.442695
    %v794 = vpow.pop %v793
    %v795 = vmul.f32 %v737, 1.442695
    %v796 = vpow.pop %v795
    %v797 = vmul.f32 %v738, 1.442695
    %v798 = vpow.pop %v797
    %v799 = vmul.f32 %v739, 1.442695
    %v800 = vpow.pop %v799
    %v801 = vmul.f32 %v740, 1.442695
    %v802 = vpow.pop %v801
    %v803 = vmul.f32 %v741, 1.442695
    %v804 = vpow.pop %v803
    %v805 = vmul.f32 %v742, 1.442695
    %v806 = vpow.pop %v805
    %839 = vrot.lane.b32.xlu0 %v69, 16
    %v840 = vpop.permute.xlu0 %839
    %841 = vrot.lane.b32.xlu0 %v70, 16
    %v842 = vpop.permute.xlu0 %841
    %843 = vrot.lane.b32.xlu0 %v71, 16
    %v844 = vpop.permute.xlu0 %843
    %845 = vrot.lane.b32.xlu0 %v72, 16
    %v846 = vpop.permute.xlu0 %845
    %847 = vrot.lane.b32.xlu0 %v73, 16
    %v848 = vpop.permute.xlu0 %847
    %849 = vrot.lane.b32.xlu0 %v74, 16
    %v850 = vpop.permute.xlu0 %849
    %851 = vrot.lane.b32.xlu0 %v75, 16
    %v852 = vpop.permute.xlu0 %851
    %853 = vrot.lane.b32.xlu0 %v76, 16
    %v854 = vpop.permute.xlu0 %853
    %855 = vrot.lane.b32.xlu0 %v77, 16
    %v856 = vpop.permute.xlu0 %855
    %857 = vrot.lane.b32.xlu0 %v78, 16
    %v858 = vpop.permute.xlu0 %857
    %859 = vrot.lane.b32.xlu0 %v79, 16
    %v860 = vpop.permute.xlu0 %859
    %861 = vrot.lane.b32.xlu0 %v80, 16
    %v862 = vpop.permute.xlu0 %861
    %863 = vrot.lane.b32.xlu0 %v81, 16
    %v864 = vpop.permute.xlu0 %863
    %865 = vrot.lane.b32.xlu0 %v82, 16
    %v866 = vpop.permute.xlu0 %865
    %867 = vrot.lane.b32.xlu0 %v83, 16
    %v868 = vpop.permute.xlu0 %867
    %869 = vrot.lane.b32.xlu0 %v84, 16
    %v870 = vpop.permute.xlu0 %869
    %871 = vrot.lane.b32.xlu0 %v85, 16
    %v872 = vpop.permute.xlu0 %871
    %873 = vrot.lane.b32.xlu0 %v86, 16
    %v874 = vpop.permute.xlu0 %873
    %875 = vrot.lane.b32.xlu0 %v87, 16
    %v876 = vpop.permute.xlu0 %875
    %877 = vrot.lane.b32.xlu0 %v88, 16
    %v878 = vpop.permute.xlu0 %877
    %879 = vrot.lane.b32.xlu0 %v89, 16
    %v880 = vpop.permute.xlu0 %879
    %881 = vrot.lane.b32.xlu0 %v90, 16
    %v882 = vpop.permute.xlu0 %881
    %883 = vrot.lane.b32.xlu0 %v91, 16
    %v884 = vpop.permute.xlu0 %883
    %885 = vrot.lane.b32.xlu0 %v92, 16
    %v886 = vpop.permute.xlu0 %885
    %887 = vrot.lane.b32.xlu0 %v93, 16
    %v888 = vpop.permute.xlu0 %887
    %889 = vrot.lane.b32.xlu0 %v94, 16
    %v890 = vpop.permute.xlu0 %889
    %891 = vrot.lane.b32.xlu0 %v95, 16
    %v892 = vpop.permute.xlu0 %891
    %893 = vrot.lane.b32.xlu0 %v96, 16
    %v894 = vpop.permute.xlu0 %893
    %895 = vrot.lane.b32.xlu0 %v97, 16
    %v896 = vpop.permute.xlu0 %895
    %897 = vrot.lane.b32.xlu0 %v98, 16
    %v898 = vpop.permute.xlu0 %897
    %899 = vrot.lane.b32.xlu0 %v99, 16
    %v900 = vpop.permute.xlu0 %899
    %901 = vrot.lane.b32.xlu0 %v100, 16
    %v902 = vpop.permute.xlu0 %901
    %v935 = vmul.f32 %v744, %v840
    %v936 = vmul.f32 %v746, %v842
    %v937 = vmul.f32 %v748, %v844
    %v938 = vmul.f32 %v750, %v846
    %v939 = vmul.f32 %v752, %v848
    %v940 = vmul.f32 %v754, %v850
    %v941 = vmul.f32 %v756, %v852
    %v942 = vmul.f32 %v758, %v854
    %v943 = vmul.f32 %v760, %v856
    %v944 = vmul.f32 %v762, %v858
    %v945 = vmul.f32 %v764, %v860
    %v946 = vmul.f32 %v766, %v862
    %v947 = vmul.f32 %v768, %v864
    %v948 = vmul.f32 %v770, %v866
    %v949 = vmul.f32 %v772, %v868
    %v950 = vmul.f32 %v774, %v870
    %v951 = vmul.f32 %v776, %v872
    %v952 = vmul.f32 %v778, %v874
    %v953 = vmul.f32 %v780, %v876
    %v954 = vmul.f32 %v782, %v878
    %v955 = vmul.f32 %v784, %v880
    %v956 = vmul.f32 %v786, %v882
    %v957 = vmul.f32 %v788, %v884
    %v958 = vmul.f32 %v790, %v886
    %v959 = vmul.f32 %v792, %v888
    %v960 = vmul.f32 %v794, %v890
    %v961 = vmul.f32 %v796, %v892
    %v962 = vmul.f32 %v798, %v894
    %v963 = vmul.f32 %v800, %v896
    %v964 = vmul.f32 %v802, %v898
    %v965 = vmul.f32 %v804, %v900
    %v966 = vmul.f32 %v806, %v902
    %999 = vrot.lane.b32.xlu0 %v935, 112
    %v1000 = vpop.permute.xlu0 %999
    %1001 = vrot.lane.b32.xlu0 %v936, 112
    %v1002 = vpop.permute.xlu0 %1001
    %1003 = vrot.lane.b32.xlu0 %v937, 112
    %v1004 = vpop.permute.xlu0 %1003
    %1005 = vrot.lane.b32.xlu0 %v938, 112
    %v1006 = vpop.permute.xlu0 %1005
    %1007 = vrot.lane.b32.xlu0 %v939, 112
    %v1008 = vpop.permute.xlu0 %1007
    %1009 = vrot.lane.b32.xlu0 %v940, 112
    %v1010 = vpop.permute.xlu0 %1009
    %1011 = vrot.lane.b32.xlu0 %v941, 112
    %v1012 = vpop.permute.xlu0 %1011
    %1013 = vrot.lane.b32.xlu0 %v942, 112
    %v1014 = vpop.permute.xlu0 %1013
    %1015 = vrot.lane.b32.xlu0 %v943, 112
    %v1016 = vpop.permute.xlu0 %1015
    %1017 = vrot.lane.b32.xlu0 %v944, 112
    %v1018 = vpop.permute.xlu0 %1017
    %1019 = vrot.lane.b32.xlu0 %v945, 112
    %v1020 = vpop.permute.xlu0 %1019
    %1021 = vrot.lane.b32.xlu0 %v946, 112
    %v1022 = vpop.permute.xlu0 %1021
    %1023 = vrot.lane.b32.xlu0 %v947, 112
    %v1024 = vpop.permute.xlu0 %1023
    %1025 = vrot.lane.b32.xlu0 %v948, 112
    %v1026 = vpop.permute.xlu0 %1025
    %1027 = vrot.lane.b32.xlu0 %v949, 112
    %v1028 = vpop.permute.xlu0 %1027
    %1029 = vrot.lane.b32.xlu0 %v950, 112
    %v1030 = vpop.permute.xlu0 %1029
    %1031 = vrot.lane.b32.xlu0 %v951, 112
    %v1032 = vpop.permute.xlu0 %1031
    %1033 = vrot.lane.b32.xlu0 %v952, 112
    %v1034 = vpop.permute.xlu0 %1033
    %1035 = vrot.lane.b32.xlu0 %v953, 112
    %v1036 = vpop.permute.xlu0 %1035
    %1037 = vrot.lane.b32.xlu0 %v954, 112
    %v1038 = vpop.permute.xlu0 %1037
    %1039 = vrot.lane.b32.xlu0 %v955, 112
    %v1040 = vpop.permute.xlu0 %1039
    %1041 = vrot.lane.b32.xlu0 %v956, 112
    %v1042 = vpop.permute.xlu0 %1041
    %1043 = vrot.lane.b32.xlu0 %v957, 112
    %v1044 = vpop.permute.xlu0 %1043
    %1045 = vrot.lane.b32.xlu0 %v958, 112
    %v1046 = vpop.permute.xlu0 %1045
    %1047 = vrot.lane.b32.xlu0 %v959, 112
    %v1048 = vpop.permute.xlu0 %1047
    %1049 = vrot.lane.b32.xlu0 %v960, 112
    %v1050 = vpop.permute.xlu0 %1049
    %1051 = vrot.lane.b32.xlu0 %v961, 112
    %v1052 = vpop.permute.xlu0 %1051
    %1053 = vrot.lane.b32.xlu0 %v962, 112
    %v1054 = vpop.permute.xlu0 %1053
    %1055 = vrot.lane.b32.xlu0 %v963, 112
    %v1056 = vpop.permute.xlu0 %1055
    %1057 = vrot.lane.b32.xlu0 %v964, 112
    %v1058 = vpop.permute.xlu0 %1057
    %1059 = vrot.lane.b32.xlu0 %v965, 112
    %v1060 = vpop.permute.xlu0 %1059
    %1061 = vrot.lane.b32.xlu0 %v966, 112
    %v1062 = vpop.permute.xlu0 %1061
    %v1095 = vadd.f32 %v585, %v1000
    %v1096 = vadd.f32 %v588, %v1002
    %v1097 = vadd.f32 %v593, %v1004
    %v1098 = vadd.f32 %v596, %v1006
    %v1099 = vadd.f32 %v601, %v1008
    %v1100 = vadd.f32 %v604, %v1010
    %v1101 = vadd.f32 %v609, %v1012
    %v1102 = vadd.f32 %v612, %v1014
    %v1103 = vadd.f32 %v617, %v1016
    %v1104 = vadd.f32 %v620, %v1018
    %v1105 = vadd.f32 %v625, %v1020
    %v1106 = vadd.f32 %v628, %v1022
    %v1107 = vadd.f32 %v633, %v1024
    %v1108 = vadd.f32 %v636, %v1026
    %v1109 = vadd.f32 %v641, %v1028
    %v1110 = vadd.f32 %v644, %v1030
    %v1111 = vadd.f32 %v649, %v1032
    %v1112 = vadd.f32 %v652, %v1034
    %v1113 = vadd.f32 %v657, %v1036
    %v1114 = vadd.f32 %v660, %v1038
    %v1115 = vadd.f32 %v665, %v1040
    %v1116 = vadd.f32 %v668, %v1042
    %v1117 = vadd.f32 %v673, %v1044
    %v1118 = vadd.f32 %v676, %v1046
    %v1119 = vadd.f32 %v681, %v1048
    %v1120 = vadd.f32 %v684, %v1050
    %v1121 = vadd.f32 %v689, %v1052
    %v1122 = vadd.f32 %v692, %v1054
    %v1123 = vadd.f32 %v697, %v1056
    %v1124 = vadd.f32 %v700, %v1058
    %v1125 = vadd.f32 %v705, %v1060
    %v1126 = vadd.f32 %v708, %v1062
    %v1127 = vpack.c.bf16 %v1096, %v1095
    %v1128 = vpack.c.bf16 %v1098, %v1097
    %v1129 = vpack.c.bf16 %v1100, %v1099
    %v1130 = vpack.c.bf16 %v1102, %v1101
    %v1131 = vpack.c.bf16 %v1104, %v1103
    %v1132 = vpack.c.bf16 %v1106, %v1105
    %v1133 = vpack.c.bf16 %v1108, %v1107
    %v1134 = vpack.c.bf16 %v1110, %v1109
    %v1135 = vpack.c.bf16 %v1112, %v1111
    %v1136 = vpack.c.bf16 %v1114, %v1113
    %v1137 = vpack.c.bf16 %v1116, %v1115
    %v1138 = vpack.c.bf16 %v1118, %v1117
    %v1139 = vpack.c.bf16 %v1120, %v1119
    %v1140 = vpack.c.bf16 %v1122, %v1121
    %v1141 = vpack.c.bf16 %v1124, %v1123
    %v1142 = vpack.c.bf16 %v1126, %v1125
    %v1143 = vld [vmem:[%s6] sm:$0xf]
    %v1144 = vld [vmem:[%s6 + $0x4] sm:$0xf]
    %v1145 = vld [vmem:[%s7] sm:$0x1]
    %v1147 = vlaneseq
    %v1148 = vshrl.u32 %v1147, 7
    %v1149 = vsub.s32 0, %v1148
    %v1150 = vrot.slane %v1145, %v1149
    %v1154 = vunpack.c.l.b16 %v1143
    %v1155 = vunpack.c.l.b16 %v1144
    %v1156 = vpack.c.b16 %v1155, %v1154
    %vm1158 = vcmask 130048
    %v1160 = vsel %vm1158, %v1127, 0
    %v1163 = vsel %vm1158, %v1128, 0
    %v1166 = vsel %vm1158, %v1129, 0
    %v1169 = vsel %vm1158, %v1130, 0
    %v1172 = vsel %vm1158, %v1131, 0
    %v1175 = vsel %vm1158, %v1132, 0
    %v1178 = vsel %vm1158, %v1133, 0
    %v1181 = vsel %vm1158, %v1134, 0
    %v1184 = vsel %vm1158, %v1135, 0
    %v1187 = vsel %vm1158, %v1136, 0
    %v1190 = vsel %vm1158, %v1137, 0
    %v1193 = vsel %vm1158, %v1138, 0
    %v1196 = vsel %vm1158, %v1139, 0
    %v1199 = vsel %vm1158, %v1140, 0
    %v1202 = vsel %vm1158, %v1141, 0
    %v1205 = vsel %vm1158, %v1142, 0
    %1207 = vmatprep.subr.bf16.mxu0 0
    %1208 = vmatpush1.bf16.msra.mxu0 0
    %1209 = vmatprep.subr.bf16.mxu0 0
    %1210 = vmatpush1.bf16.msra.mxu0 0
    %1211 = vmatprep.subr.bf16.mxu0 0
    %1212 = vmatpush1.bf16.msra.mxu0 0
    %1213 = vmatprep.subr.bf16.mxu0 0
    %1214 = vmatpush1.bf16.msra.mxu0 0
    %1215 = vmatprep.subr.bf16.mxu0 0
    %1216 = vmatpush1.bf16.msra.mxu0 0
    %1217 = vmatprep.subr.bf16.mxu0 0
    %1218 = vmatpush1.bf16.msra.mxu0 0
    %1219 = vmatprep.subr.bf16.mxu0 0
    %1220 = vmatpush1.bf16.msra.mxu0 0
    %1221 = vmatprep.subr.bf16.mxu0 0
    %1222 = vmatpush1.bf16.msra.mxu0 %v1156
    %1223 = vmatprep.subr.bf16.mxu0 0
    %1224 = vmatpush2.bf16.msra.mxu0 0
    %1225 = vmatprep.subr.bf16.mxu0 0
    %1226 = vmatpush2.bf16.msra.mxu0 0
    %1227 = vmatprep.subr.bf16.mxu0 0
    %1228 = vmatpush2.bf16.msra.mxu0 0
    %1229 = vmatprep.subr.bf16.mxu0 0
    %1230 = vmatpush2.bf16.msra.mxu0 0
    %1231 = vmatprep.subr.bf16.mxu0 0
    %1232 = vmatpush2.bf16.msra.mxu0 0
    %1233 = vmatprep.subr.bf16.mxu0 0
    %1234 = vmatpush2.bf16.msra.mxu0 0
    %1235 = vmatprep.subr.bf16.mxu0 0
    %1236 = vmatpush2.bf16.msra.mxu0 0
    %1237 = vmatprep.subr.bf16.mxu0 0
    %1238 = vmatpush2.bf16.msra.mxu0 0
    %1239 = vmatprep.mubr.bf16.mxu0 0
    %1240 = vmatmul.mubr.bf16.gmra.mxu0 %v1160
    %v1241 = vpop.f32.mrf.mxu0
    %v1242 = vadd.f32 %v1150, %v1241
    %v1243 = vpop.f32.mrf.mxu0
    %v1244 = vpop.f32.mrf.mxu0
    %v1245 = vadd.f32 %v1150, %v1244
    %v1246 = vpop.f32.mrf.mxu0
    %1247 = vmatprep.mubr.bf16.mxu0 0
    %1248 = vmatmul.mubr.bf16.gmra.mxu0 %v1163
    %v1249 = vpop.f32.mrf.mxu0
    %v1250 = vadd.f32 %v1150, %v1249
    %v1251 = vpop.f32.mrf.mxu0
    %v1252 = vpop.f32.mrf.mxu0
    %v1253 = vadd.f32 %v1150, %v1252
    %v1254 = vpop.f32.mrf.mxu0
    %1255 = vmatprep.mubr.bf16.mxu0 0
    %1256 = vmatmul.mubr.bf16.gmra.mxu0 %v1166
    %v1257 = vpop.f32.mrf.mxu0
    %v1258 = vadd.f32 %v1150, %v1257
    %v1259 = vpop.f32.mrf.mxu0
    %v1260 = vpop.f32.mrf.mxu0
    %v1261 = vadd.f32 %v1150, %v1260
    %v1262 = vpop.f32.mrf.mxu0
    %1263 = vmatprep.mubr.bf16.mxu0 0
    %1264 = vmatmul.mubr.bf16.gmra.mxu0 %v1169
    %v1265 = vpop.f32.mrf.mxu0
    %v1266 = vadd.f32 %v1150, %v1265
    %v1267 = vpop.f32.mrf.mxu0
    %v1268 = vpop.f32.mrf.mxu0
    %v1269 = vadd.f32 %v1150, %v1268
    %v1270 = vpop.f32.mrf.mxu0
    %1271 = vmatprep.mubr.bf16.mxu0 0
    %1272 = vmatmul.mubr.bf16.gmra.mxu0 %v1172
    %v1273 = vpop.f32.mrf.mxu0
    %v1274 = vadd.f32 %v1150, %v1273
    %v1275 = vpop.f32.mrf.mxu0
    %v1276 = vpop.f32.mrf.mxu0
    %v1277 = vadd.f32 %v1150, %v1276
    %v1278 = vpop.f32.mrf.mxu0
    %1279 = vmatprep.mubr.bf16.mxu0 0
    %1280 = vmatmul.mubr.bf16.gmra.mxu0 %v1175
    %v1281 = vpop.f32.mrf.mxu0
    %v1282 = vadd.f32 %v1150, %v1281
    %v1283 = vpop.f32.mrf.mxu0
    %v1284 = vpop.f32.mrf.mxu0
    %v1285 = vadd.f32 %v1150, %v1284
    %v1286 = vpop.f32.mrf.mxu0
    %1287 = vmatprep.mubr.bf16.mxu0 0
    %1288 = vmatmul.mubr.bf16.gmra.mxu0 %v1178
    %v1289 = vpop.f32.mrf.mxu0
    %v1290 = vadd.f32 %v1150, %v1289
    %v1291 = vpop.f32.mrf.mxu0
    %v1292 = vpop.f32.mrf.mxu0
    %v1293 = vadd.f32 %v1150, %v1292
    %v1294 = vpop.f32.mrf.mxu0
    %1295 = vmatprep.mubr.bf16.mxu0 0
    %1296 = vmatmul.mubr.bf16.gmra.mxu0 %v1181
    %v1297 = vpop.f32.mrf.mxu0
    %v1298 = vadd.f32 %v1150, %v1297
    %v1299 = vpop.f32.mrf.mxu0
    %v1300 = vpop.f32.mrf.mxu0
    %v1301 = vadd.f32 %v1150, %v1300
    %v1302 = vpop.f32.mrf.mxu0
    %1303 = vmatprep.mubr.bf16.mxu0 0
    %1304 = vmatmul.mubr.bf16.gmra.mxu0 %v1184
    %v1305 = vpop.f32.mrf.mxu0
    %v1306 = vadd.f32 %v1150, %v1305
    %v1307 = vpop.f32.mrf.mxu0
    %v1308 = vpop.f32.mrf.mxu0
    %v1309 = vadd.f32 %v1150, %v1308
    %v1310 = vpop.f32.mrf.mxu0
    %1311 = vmatprep.mubr.bf16.mxu0 0
    %1312 = vmatmul.mubr.bf16.gmra.mxu0 %v1187
    %v1313 = vpop.f32.mrf.mxu0
    %v1314 = vadd.f32 %v1150, %v1313
    %v1315 = vpop.f32.mrf.mxu0
    %v1316 = vpop.f32.mrf.mxu0
    %v1317 = vadd.f32 %v1150, %v1316
    %v1318 = vpop.f32.mrf.mxu0
    %1319 = vmatprep.mubr.bf16.mxu0 0
    %1320 = vmatmul.mubr.bf16.gmra.mxu0 %v1190
    %v1321 = vpop.f32.mrf.mxu0
    %v1322 = vadd.f32 %v1150, %v1321
    %v1323 = vpop.f32.mrf.mxu0
    %v1324 = vpop.f32.mrf.mxu0
    %v1325 = vadd.f32 %v1150, %v1324
    %v1326 = vpop.f32.mrf.mxu0
    %1327 = vmatprep.mubr.bf16.mxu0 0
    %1328 = vmatmul.mubr.bf16.gmra.mxu0 %v1193
    %v1329 = vpop.f32.mrf.mxu0
    %v1330 = vadd.f32 %v1150, %v1329
    %v1331 = vpop.f32.mrf.mxu0
    %v1332 = vpop.f32.mrf.mxu0
    %v1333 = vadd.f32 %v1150, %v1332
    %v1334 = vpop.f32.mrf.mxu0
    %1335 = vmatprep.mubr.bf16.mxu0 0
    %1336 = vmatmul.mubr.bf16.gmra.mxu0 %v1196
    %v1337 = vpop.f32.mrf.mxu0
    %v1338 = vadd.f32 %v1150, %v1337
    %v1339 = vpop.f32.mrf.mxu0
    %v1340 = vpop.f32.mrf.mxu0
    %v1341 = vadd.f32 %v1150, %v1340
    %v1342 = vpop.f32.mrf.mxu0
    %1343 = vmatprep.mubr.bf16.mxu0 0
    %1344 = vmatmul.mubr.bf16.gmra.mxu0 %v1199
    %v1345 = vpop.f32.mrf.mxu0
    %v1346 = vadd.f32 %v1150, %v1345
    %v1347 = vpop.f32.mrf.mxu0
    %v1348 = vpop.f32.mrf.mxu0
    %v1349 = vadd.f32 %v1150, %v1348
    %v1350 = vpop.f32.mrf.mxu0
    %1351 = vmatprep.mubr.bf16.mxu0 0
    %1352 = vmatmul.mubr.bf16.gmra.mxu0 %v1202
    %v1353 = vpop.f32.mrf.mxu0
    %v1354 = vadd.f32 %v1150, %v1353
    %v1355 = vpop.f32.mrf.mxu0
    %v1356 = vpop.f32.mrf.mxu0
    %v1357 = vadd.f32 %v1150, %v1356
    %v1358 = vpop.f32.mrf.mxu0
    %1359 = vmatprep.mubr.bf16.mxu0 0
    %1360 = vmatmul.mubr.bf16.gmra.mxu0 %v1205
    %v1361 = vpop.f32.mrf.mxu0
    %v1362 = vadd.f32 %v1150, %v1361
    %v1363 = vpop.f32.mrf.mxu0
    %v1364 = vpop.f32.mrf.mxu0
    %v1365 = vadd.f32 %v1150, %v1364
    %v1366 = vpop.f32.mrf.mxu0
    %1367 = vdwg.mxu0
    %v1368 = vmax.f32 %v1242, 0.0
    %v1369 = vmax.f32 %v1245, 0.0
    %v1370 = vmax.f32 %v1250, 0.0
    %v1371 = vmax.f32 %v1253, 0.0
    %v1372 = vmax.f32 %v1258, 0.0
    %v1373 = vmax.f32 %v1261, 0.0
    %v1374 = vmax.f32 %v1266, 0.0
    %v1375 = vmax.f32 %v1269, 0.0
    %v1376 = vmax.f32 %v1274, 0.0
    %v1377 = vmax.f32 %v1277, 0.0
    %v1378 = vmax.f32 %v1282, 0.0
    %v1379 = vmax.f32 %v1285, 0.0
    %v1380 = vmax.f32 %v1290, 0.0
    %v1381 = vmax.f32 %v1293, 0.0
    %v1382 = vmax.f32 %v1298, 0.0
    %v1383 = vmax.f32 %v1301, 0.0
    %v1384 = vmax.f32 %v1306, 0.0
    %v1385 = vmax.f32 %v1309, 0.0
    %v1386 = vmax.f32 %v1314, 0.0
    %v1387 = vmax.f32 %v1317, 0.0
    %v1388 = vmax.f32 %v1322, 0.0
    %v1389 = vmax.f32 %v1325, 0.0
    %v1390 = vmax.f32 %v1330, 0.0
    %v1391 = vmax.f32 %v1333, 0.0
    %v1392 = vmax.f32 %v1338, 0.0
    %v1393 = vmax.f32 %v1341, 0.0
    %v1394 = vmax.f32 %v1346, 0.0
    %v1395 = vmax.f32 %v1349, 0.0
    %v1396 = vmax.f32 %v1354, 0.0
    %v1397 = vmax.f32 %v1357, 0.0
    %v1398 = vmax.f32 %v1362, 0.0
    %v1399 = vmax.f32 %v1365, 0.0
    %v1400 = vpack.c.bf16 %v1369, %v1368
    %v1401 = vpack.c.bf16 %v1371, %v1370
    %v1402 = vpack.c.bf16 %v1373, %v1372
    %v1403 = vpack.c.bf16 %v1375, %v1374
    %v1404 = vpack.c.bf16 %v1377, %v1376
    %v1405 = vpack.c.bf16 %v1379, %v1378
    %v1406 = vpack.c.bf16 %v1381, %v1380
    %v1407 = vpack.c.bf16 %v1383, %v1382
    %v1408 = vpack.c.bf16 %v1385, %v1384
    %v1409 = vpack.c.bf16 %v1387, %v1386
    %v1410 = vpack.c.bf16 %v1389, %v1388
    %v1411 = vpack.c.bf16 %v1391, %v1390
    %v1412 = vpack.c.bf16 %v1393, %v1392
    %v1413 = vpack.c.bf16 %v1395, %v1394
    %v1414 = vpack.c.bf16 %v1397, %v1396
    %v1415 = vpack.c.bf16 %v1399, %v1398
    %v1416 = vld [vmem:[%s8] sm:$0xf]
    %v1417 = vld [vmem:[%s8 + $0x4] sm:$0xf]
    %v1418 = vld [vmem:[%s8 + $0x8] sm:$0xf]
    %v1419 = vld [vmem:[%s8 + $0xc] sm:$0xf]
    %v1420 = vld [vmem:[%s8 + $0x10] sm:$0x1]
    %v1421 = vld [vmem:[%s9] sm:$0x1]
    %v1423 = vlaneseq
    %v1424 = vshrl.u32 %v1423, 7
    %v1425 = vsub.s32 0, %v1424
    %v1426 = vrot.slane %v1421, %v1425
    %v1433 = vunpack.c.l.b16 %v1416
    %v1434 = vunpack.c.l.b16 %v1417
    %v1435 = vunpack.c.l.b16 %v1418
    %v1436 = vunpack.c.l.b16 %v1419
    %v1437 = vunpack.c.l.b16 %v1420
    %v1438 = vpack.c.b16 %v1434, %v1433
    %v1439 = vpack.c.b16 %v1436, %v1435
    %v1440 = vpack.c.b16 %v1437, %v1437
    %vm1443 = vcmask 269312
    %v1445 = vsel %vm1443, %v1400, 0
    %v1448 = vsel %vm1443, %v1401, 0
    %v1451 = vsel %vm1443, %v1402, 0
    %v1454 = vsel %vm1443, %v1403, 0
    %v1457 = vsel %vm1443, %v1404, 0
    %v1460 = vsel %vm1443, %v1405, 0
    %v1463 = vsel %vm1443, %v1406, 0
    %v1466 = vsel %vm1443, %v1407, 0
    %v1469 = vsel %vm1443, %v1408, 0
    %v1472 = vsel %vm1443, %v1409, 0
    %v1475 = vsel %vm1443, %v1410, 0
    %v1478 = vsel %vm1443, %v1411, 0
    %v1481 = vsel %vm1443, %v1412, 0
    %v1484 = vsel %vm1443, %v1413, 0
    %v1487 = vsel %vm1443, %v1414, 0
    %v1490 = vsel %vm1443, %v1415, 0
    %vm1492 = vcmask 1040384
    %v1493 = vsel 0, 4294967295, 65535
    %v1494 = vsel %vm1492, %v1493, 0
    %v1496 = vand.u32 %v1440, %v1494
    %1498 = vmatprep.subr.bf16.mxu0 0
    %1499 = vmatpush1.bf16.msra.mxu0 0
    %1500 = vmatprep.subr.bf16.mxu0 0
    %1501 = vmatpush1.bf16.msra.mxu0 0
    %1502 = vmatprep.subr.bf16.mxu0 0
    %1503 = vmatpush1.bf16.msra.mxu0 0
    %1504 = vmatprep.subr.bf16.mxu0 0
    %1505 = vmatpush1.bf16.msra.mxu0 0
    %1506 = vmatprep.subr.bf16.mxu0 0
    %1507 = vmatpush1.bf16.msra.mxu0 0
    %1508 = vmatprep.subr.bf16.mxu0 0
    %1509 = vmatpush1.bf16.msra.mxu0 %v1496
    %1510 = vmatprep.subr.bf16.mxu0 0
    %1511 = vmatpush1.bf16.msra.mxu0 %v1439
    %1512 = vmatprep.subr.bf16.mxu0 0
    %1513 = vmatpush1.bf16.msra.mxu0 %v1438
    %1514 = vmatprep.subr.bf16.mxu0 0
    %1515 = vmatpush2.bf16.msra.mxu0 0
    %1516 = vmatprep.subr.bf16.mxu0 0
    %1517 = vmatpush2.bf16.msra.mxu0 0
    %1518 = vmatprep.subr.bf16.mxu0 0
    %1519 = vmatpush2.bf16.msra.mxu0 0
    %1520 = vmatprep.subr.bf16.mxu0 0
    %1521 = vmatpush2.bf16.msra.mxu0 0
    %1522 = vmatprep.subr.bf16.mxu0 0
    %1523 = vmatpush2.bf16.msra.mxu0 0
    %1524 = vmatprep.subr.bf16.mxu0 0
    %1525 = vmatpush2.bf16.msra.mxu0 0
    %1526 = vmatprep.subr.bf16.mxu0 0
    %1527 = vmatpush2.bf16.msra.mxu0 0
    %1528 = vmatprep.subr.bf16.mxu0 0
    %1529 = vmatpush2.bf16.msra.mxu0 0
    %1530 = vmatprep.mubr.bf16.mxu0 0
    %1531 = vmatmul.mubr.bf16.gmra.mxu0 %v1445
    %v1532 = vpop.f32.mrf.mxu0
    %v1533 = vadd.f32 %v1426, %v1532
    %v1534 = vpop.f32.mrf.mxu0
    %v1535 = vpop.f32.mrf.mxu0
    %v1536 = vadd.f32 %v1426, %v1535
    %v1537 = vpop.f32.mrf.mxu0
    %1538 = vmatprep.mubr.bf16.mxu0 0
    %1539 = vmatmul.mubr.bf16.gmra.mxu0 %v1448
    %v1540 = vpop.f32.mrf.mxu0
    %v1541 = vadd.f32 %v1426, %v1540
    %v1542 = vpop.f32.mrf.mxu0
    %v1543 = vpop.f32.mrf.mxu0
    %v1544 = vadd.f32 %v1426, %v1543
    %v1545 = vpop.f32.mrf.mxu0
    %1546 = vmatprep.mubr.bf16.mxu0 0
    %1547 = vmatmul.mubr.bf16.gmra.mxu0 %v1451
    %v1548 = vpop.f32.mrf.mxu0
    %v1549 = vadd.f32 %v1426, %v1548
    %v1550 = vpop.f32.mrf.mxu0
    %v1551 = vpop.f32.mrf.mxu0
    %v1552 = vadd.f32 %v1426, %v1551
    %v1553 = vpop.f32.mrf.mxu0
    %1554 = vmatprep.mubr.bf16.mxu0 0
    %1555 = vmatmul.mubr.bf16.gmra.mxu0 %v1454
    %v1556 = vpop.f32.mrf.mxu0
    %v1557 = vadd.f32 %v1426, %v1556
    %v1558 = vpop.f32.mrf.mxu0
    %v1559 = vpop.f32.mrf.mxu0
    %v1560 = vadd.f32 %v1426, %v1559
    %v1561 = vpop.f32.mrf.mxu0
    %1562 = vmatprep.mubr.bf16.mxu0 0
    %1563 = vmatmul.mubr.bf16.gmra.mxu0 %v1457
    %v1564 = vpop.f32.mrf.mxu0
    %v1565 = vadd.f32 %v1426, %v1564
    %v1566 = vpop.f32.mrf.mxu0
    %v1567 = vpop.f32.mrf.mxu0
    %v1568 = vadd.f32 %v1426, %v1567
    %v1569 = vpop.f32.mrf.mxu0
    %1570 = vmatprep.mubr.bf16.mxu0 0
    %1571 = vmatmul.mubr.bf16.gmra.mxu0 %v1460
    %v1572 = vpop.f32.mrf.mxu0
    %v1573 = vadd.f32 %v1426, %v1572
    %v1574 = vpop.f32.mrf.mxu0
    %v1575 = vpop.f32.mrf.mxu0
    %v1576 = vadd.f32 %v1426, %v1575
    %v1577 = vpop.f32.mrf.mxu0
    %1578 = vmatprep.mubr.bf16.mxu0 0
    %1579 = vmatmul.mubr.bf16.gmra.mxu0 %v1463
    %v1580 = vpop.f32.mrf.mxu0
    %v1581 = vadd.f32 %v1426, %v1580
    %v1582 = vpop.f32.mrf.mxu0
    %v1583 = vpop.f32.mrf.mxu0
    %v1584 = vadd.f32 %v1426, %v1583
    %v1585 = vpop.f32.mrf.mxu0
    %1586 = vmatprep.mubr.bf16.mxu0 0
    %1587 = vmatmul.mubr.bf16.gmra.mxu0 %v1466
    %v1588 = vpop.f32.mrf.mxu0
    %v1589 = vadd.f32 %v1426, %v1588
    %v1590 = vpop.f32.mrf.mxu0
    %v1591 = vpop.f32.mrf.mxu0
    %v1592 = vadd.f32 %v1426, %v1591
    %v1593 = vpop.f32.mrf.mxu0
    %1594 = vmatprep.mubr.bf16.mxu0 0
    %1595 = vmatmul.mubr.bf16.gmra.mxu0 %v1469
    %v1596 = vpop.f32.mrf.mxu0
    %v1597 = vadd.f32 %v1426, %v1596
    %v1598 = vpop.f32.mrf.mxu0
    %v1599 = vpop.f32.mrf.mxu0
    %v1600 = vadd.f32 %v1426, %v1599
    %v1601 = vpop.f32.mrf.mxu0
    %1602 = vmatprep.mubr.bf16.mxu0 0
    %1603 = vmatmul.mubr.bf16.gmra.mxu0 %v1472
    %v1604 = vpop.f32.mrf.mxu0
    %v1605 = vadd.f32 %v1426, %v1604
    %v1606 = vpop.f32.mrf.mxu0
    %v1607 = vpop.f32.mrf.mxu0
    %v1608 = vadd.f32 %v1426, %v1607
    %v1609 = vpop.f32.mrf.mxu0
    %1610 = vmatprep.mubr.bf16.mxu0 0
    %1611 = vmatmul.mubr.bf16.gmra.mxu0 %v1475
    %v1612 = vpop.f32.mrf.mxu0
    %v1613 = vadd.f32 %v1426, %v1612
    %v1614 = vpop.f32.mrf.mxu0
    %v1615 = vpop.f32.mrf.mxu0
    %v1616 = vadd.f32 %v1426, %v1615
    %v1617 = vpop.f32.mrf.mxu0
    %1618 = vmatprep.mubr.bf16.mxu0 0
    %1619 = vmatmul.mubr.bf16.gmra.mxu0 %v1478
    %v1620 = vpop.f32.mrf.mxu0
    %v1621 = vadd.f32 %v1426, %v1620
    %v1622 = vpop.f32.mrf.mxu0
    %v1623 = vpop.f32.mrf.mxu0
    %v1624 = vadd.f32 %v1426, %v1623
    %v1625 = vpop.f32.mrf.mxu0
    %1626 = vmatprep.mubr.bf16.mxu0 0
    %1627 = vmatmul.mubr.bf16.gmra.mxu0 %v1481
    %v1628 = vpop.f32.mrf.mxu0
    %v1629 = vadd.f32 %v1426, %v1628
    %v1630 = vpop.f32.mrf.mxu0
    %v1631 = vpop.f32.mrf.mxu0
    %v1632 = vadd.f32 %v1426, %v1631
    %v1633 = vpop.f32.mrf.mxu0
    %1634 = vmatprep.mubr.bf16.mxu0 0
    %1635 = vmatmul.mubr.bf16.gmra.mxu0 %v1484
    %v1636 = vpop.f32.mrf.mxu0
    %v1637 = vadd.f32 %v1426, %v1636
    %v1638 = vpop.f32.mrf.mxu0
    %v1639 = vpop.f32.mrf.mxu0
    %v1640 = vadd.f32 %v1426, %v1639
    %v1641 = vpop.f32.mrf.mxu0
    %1642 = vmatprep.mubr.bf16.mxu0 0
    %1643 = vmatmul.mubr.bf16.gmra.mxu0 %v1487
    %v1644 = vpop.f32.mrf.mxu0
    %v1645 = vadd.f32 %v1426, %v1644
    %v1646 = vpop.f32.mrf.mxu0
    %v1647 = vpop.f32.mrf.mxu0
    %v1648 = vadd.f32 %v1426, %v1647
    %v1649 = vpop.f32.mrf.mxu0
    %1650 = vmatprep.mubr.bf16.mxu0 0
    %1651 = vmatmul.mubr.bf16.gmra.mxu0 %v1490
    %v1652 = vpop.f32.mrf.mxu0
    %v1653 = vadd.f32 %v1426, %v1652
    %v1654 = vpop.f32.mrf.mxu0
    %v1655 = vpop.f32.mrf.mxu0
    %v1656 = vadd.f32 %v1426, %v1655
    %v1657 = vpop.f32.mrf.mxu0
    %1658 = vdwg.mxu0
    %v1659 = vxor.u32 %v1533, 2147483648
    %v1660 = vxor.u32 %v1536, 2147483648
    %v1661 = vxor.u32 %v1541, 2147483648
    %v1662 = vxor.u32 %v1544, 2147483648
    %v1663 = vxor.u32 %v1549, 2147483648
    %v1664 = vxor.u32 %v1552, 2147483648
    %v1665 = vxor.u32 %v1557, 2147483648
    %v1666 = vxor.u32 %v1560, 2147483648
    %v1667 = vxor.u32 %v1565, 2147483648
    %v1668 = vxor.u32 %v1568, 2147483648
    %v1669 = vxor.u32 %v1573, 2147483648
    %v1670 = vxor.u32 %v1576, 2147483648
    %v1671 = vxor.u32 %v1581, 2147483648
    %v1672 = vxor.u32 %v1584, 2147483648
    %v1673 = vxor.u32 %v1589, 2147483648
    %v1674 = vxor.u32 %v1592, 2147483648
    %v1675 = vxor.u32 %v1597, 2147483648
    %v1676 = vxor.u32 %v1600, 2147483648
    %v1677 = vxor.u32 %v1605, 2147483648
    %v1678 = vxor.u32 %v1608, 2147483648
    %v1679 = vxor.u32 %v1613, 2147483648
    %v1680 = vxor.u32 %v1616, 2147483648
    %v1681 = vxor.u32 %v1621, 2147483648
    %v1682 = vxor.u32 %v1624, 2147483648
    %v1683 = vxor.u32 %v1629, 2147483648
    %v1684 = vxor.u32 %v1632, 2147483648
    %v1685 = vxor.u32 %v1637, 2147483648
    %v1686 = vxor.u32 %v1640, 2147483648
    %v1687 = vxor.u32 %v1645, 2147483648
    %v1688 = vxor.u32 %v1648, 2147483648
    %v1689 = vxor.u32 %v1653, 2147483648
    %v1690 = vxor.u32 %v1656, 2147483648
    %v1691 = vmul.f32 %v1659, 1.442695
    %v1692 = vpow.pop %v1691
    %v1693 = vmul.f32 %v1660, 1.442695
    %v1694 = vpow.pop %v1693
    %v1695 = vmul.f32 %v1661, 1.442695
    %v1696 = vpow.pop %v1695
    %v1697 = vmul.f32 %v1662, 1.442695
    %v1698 = vpow.pop %v1697
    %v1699 = vmul.f32 %v1663, 1.442695
    %v1700 = vpow.pop %v1699
    %v1701 = vmul.f32 %v1664, 1.442695
    %v1702 = vpow.pop %v1701
    %v1703 = vmul.f32 %v1665, 1.442695
    %v1704 = vpow.pop %v1703
    %v1705 = vmul.f32 %v1666, 1.442695
    %v1706 = vpow.pop %v1705
    %v1707 = vmul.f32 %v1667, 1.442695
    %v1708 = vpow.pop %v1707
    %v1709 = vmul.f32 %v1668, 1.442695
    %v1710 = vpow.pop %v1709
    %v1711 = vmul.f32 %v1669, 1.442695
    %v1712 = vpow.pop %v1711
    %v1713 = vmul.f32 %v1670, 1.442695
    %v1714 = vpow.pop %v1713
    %v1715 = vmul.f32 %v1671, 1.442695
    %v1716 = vpow.pop %v1715
    %v1717 = vmul.f32 %v1672, 1.442695
    %v1718 = vpow.pop %v1717
    %v1719 = vmul.f32 %v1673, 1.442695
    %v1720 = vpow.pop %v1719
    %v1721 = vmul.f32 %v1674, 1.442695
    %v1722 = vpow.pop %v1721
    %v1723 = vmul.f32 %v1675, 1.442695
    %v1724 = vpow.pop %v1723
    %v1725 = vmul.f32 %v1676, 1.442695
    %v1726 = vpow.pop %v1725
    %v1727 = vmul.f32 %v1677, 1.442695
    %v1728 = vpow.pop %v1727
    %v1729 = vmul.f32 %v1678, 1.442695
    %v1730 = vpow.pop %v1729
    %v1731 = vmul.f32 %v1679, 1.442695
    %v1732 = vpow.pop %v1731
    %v1733 = vmul.f32 %v1680, 1.442695
    %v1734 = vpow.pop %v1733
    %v1735 = vmul.f32 %v1681, 1.442695
    %v1736 = vpow.pop %v1735
    %v1737 = vmul.f32 %v1682, 1.442695
    %v1738 = vpow.pop %v1737
    %v1739 = vmul.f32 %v1683, 1.442695
    %v1740 = vpow.pop %v1739
    %v1741 = vmul.f32 %v1684, 1.442695
    %v1742 = vpow.pop %v1741
    %v1743 = vmul.f32 %v1685, 1.442695
    %v1744 = vpow.pop %v1743
    %v1745 = vmul.f32 %v1686, 1.442695
    %v1746 = vpow.pop %v1745
    %v1747 = vmul.f32 %v1687, 1.442695
    %v1748 = vpow.pop %v1747
    %v1749 = vmul.f32 %v1688, 1.442695
    %v1750 = vpow.pop %v1749
    %v1751 = vmul.f32 %v1689, 1.442695
    %v1752 = vpow.pop %v1751
    %v1753 = vmul.f32 %v1690, 1.442695
    %v1754 = vpow.pop %v1753
    %v1755 = vadd.f32 %v1692, 1.0
    %v1756 = vadd.f32 %v1694, 1.0
    %v1757 = vadd.f32 %v1696, 1.0
    %v1758 = vadd.f32 %v1698, 1.0
    %v1759 = vadd.f32 %v1700, 1.0
    %v1760 = vadd.f32 %v1702, 1.0
    %v1761 = vadd.f32 %v1704, 1.0
    %v1762 = vadd.f32 %v1706, 1.0
    %v1763 = vadd.f32 %v1708, 1.0
    %v1764 = vadd.f32 %v1710, 1.0
    %v1765 = vadd.f32 %v1712, 1.0
    %v1766 = vadd.f32 %v1714, 1.0
    %v1767 = vadd.f32 %v1716, 1.0
    %v1768 = vadd.f32 %v1718, 1.0
    %v1769 = vadd.f32 %v1720, 1.0
    %v1770 = vadd.f32 %v1722, 1.0
    %v1771 = vadd.f32 %v1724, 1.0
    %v1772 = vadd.f32 %v1726, 1.0
    %v1773 = vadd.f32 %v1728, 1.0
    %v1774 = vadd.f32 %v1730, 1.0
    %v1775 = vadd.f32 %v1732, 1.0
    %v1776 = vadd.f32 %v1734, 1.0
    %v1777 = vadd.f32 %v1736, 1.0
    %v1778 = vadd.f32 %v1738, 1.0
    %v1779 = vadd.f32 %v1740, 1.0
    %v1780 = vadd.f32 %v1742, 1.0
    %v1781 = vadd.f32 %v1744, 1.0
    %v1782 = vadd.f32 %v1746, 1.0
    %v1783 = vadd.f32 %v1748, 1.0
    %v1784 = vadd.f32 %v1750, 1.0
    %v1785 = vadd.f32 %v1752, 1.0
    %v1786 = vadd.f32 %v1754, 1.0
    %v1787 = vrcp.pop %v1755
    %v1788 = vmul.f32 1.0, %v1787
    %v1789 = vrcp.pop %v1756
    %v1790 = vmul.f32 1.0, %v1789
    %v1791 = vrcp.pop %v1757
    %v1792 = vmul.f32 1.0, %v1791
    %v1793 = vrcp.pop %v1758
    %v1794 = vmul.f32 1.0, %v1793
    %v1795 = vrcp.pop %v1759
    %v1796 = vmul.f32 1.0, %v1795
    %v1797 = vrcp.pop %v1760
    %v1798 = vmul.f32 1.0, %v1797
    %v1799 = vrcp.pop %v1761
    %v1800 = vmul.f32 1.0, %v1799
    %v1801 = vrcp.pop %v1762
    %v1802 = vmul.f32 1.0, %v1801
    %v1803 = vrcp.pop %v1763
    %v1804 = vmul.f32 1.0, %v1803
    %v1805 = vrcp.pop %v1764
    %v1806 = vmul.f32 1.0, %v1805
    %v1807 = vrcp.pop %v1765
    %v1808 = vmul.f32 1.0, %v1807
    %v1809 = vrcp.pop %v1766
    %v1810 = vmul.f32 1.0, %v1809
    %v1811 = vrcp.pop %v1767
    %v1812 = vmul.f32 1.0, %v1811
    %v1813 = vrcp.pop %v1768
    %v1814 = vmul.f32 1.0, %v1813
    %v1815 = vrcp.pop %v1769
    %v1816 = vmul.f32 1.0, %v1815
    %v1817 = vrcp.pop %v1770
    %v1818 = vmul.f32 1.0, %v1817
    %v1819 = vrcp.pop %v1771
    %v1820 = vmul.f32 1.0, %v1819
    %v1821 = vrcp.pop %v1772
    %v1822 = vmul.f32 1.0, %v1821
    %v1823 = vrcp.pop %v1773
    %v1824 = vmul.f32 1.0, %v1823
    %v1825 = vrcp.pop %v1774
    %v1826 = vmul.f32 1.0, %v1825
    %v1827 = vrcp.pop %v1775
    %v1828 = vmul.f32 1.0, %v1827
    %v1829 = vrcp.pop %v1776
    %v1830 = vmul.f32 1.0, %v1829
    %v1831 = vrcp.pop %v1777
    %v1832 = vmul.f32 1.0, %v1831
    %v1833 = vrcp.pop %v1778
    %v1834 = vmul.f32 1.0, %v1833
    %v1835 = vrcp.pop %v1779
    %v1836 = vmul.f32 1.0, %v1835
    %v1837 = vrcp.pop %v1780
    %v1838 = vmul.f32 1.0, %v1837
    %v1839 = vrcp.pop %v1781
    %v1840 = vmul.f32 1.0, %v1839
    %v1841 = vrcp.pop %v1782
    %v1842 = vmul.f32 1.0, %v1841
    %v1843 = vrcp.pop %v1783
    %v1844 = vmul.f32 1.0, %v1843
    %v1845 = vrcp.pop %v1784
    %v1846 = vmul.f32 1.0, %v1845
    %v1847 = vrcp.pop %v1785
    %v1848 = vmul.f32 1.0, %v1847
    %v1849 = vrcp.pop %v1786
    %v1850 = vmul.f32 1.0, %v1849
    %1851 = vst.msk [vmem:[#allocation2] sm:$0xff] %vm220, %v1788
    %1852 = vst.msk [vmem:[#allocation2 + $0x8] sm:$0xff] %vm220, %v1790
    %1853 = vst.msk [vmem:[#allocation2 + $0x10] sm:$0xff] %vm220, %v1792
    %1854 = vst.msk [vmem:[#allocation2 + $0x18] sm:$0xff] %vm220, %v1794
    %1855 = vst.msk [vmem:[#allocation2 + $0x20] sm:$0xff] %vm220, %v1796
    %1856 = vst.msk [vmem:[#allocation2 + $0x28] sm:$0xff] %vm220, %v1798
    %1857 = vst.msk [vmem:[#allocation2 + $0x30] sm:$0xff] %vm220, %v1800
    %1858 = vst.msk [vmem:[#allocation2 + $0x38] sm:$0xff] %vm220, %v1802
    %1859 = vst.msk [vmem:[#allocation2 + $0x40] sm:$0xff] %vm220, %v1804
    %1860 = vst.msk [vmem:[#allocation2 + $0x48] sm:$0xff] %vm220, %v1806
    %1861 = vst.msk [vmem:[#allocation2 + $0x50] sm:$0xff] %vm220, %v1808
    %1862 = vst.msk [vmem:[#allocation2 + $0x58] sm:$0xff] %vm220, %v1810
    %1863 = vst.msk [vmem:[#allocation2 + $0x60] sm:$0xff] %vm220, %v1812
    %1864 = vst.msk [vmem:[#allocation2 + $0x68] sm:$0xff] %vm220, %v1814
    %1865 = vst.msk [vmem:[#allocation2 + $0x70] sm:$0xff] %vm220, %v1816
    %1866 = vst.msk [vmem:[#allocation2 + $0x78] sm:$0xff] %vm220, %v1818
    %1867 = vst.msk [vmem:[#allocation2 + $0x80] sm:$0xff] %vm220, %v1820
    %1868 = vst.msk [vmem:[#allocation2 + $0x88] sm:$0xff] %vm220, %v1822
    %1869 = vst.msk [vmem:[#allocation2 + $0x90] sm:$0xff] %vm220, %v1824
    %1870 = vst.msk [vmem:[#allocation2 + $0x98] sm:$0xff] %vm220, %v1826
    %1871 = vst.msk [vmem:[#allocation2 + $0xa0] sm:$0xff] %vm220, %v1828
    %1872 = vst.msk [vmem:[#allocation2 + $0xa8] sm:$0xff] %vm220, %v1830
    %1873 = vst.msk [vmem:[#allocation2 + $0xb0] sm:$0xff] %vm220, %v1832
    %1874 = vst.msk [vmem:[#allocation2 + $0xb8] sm:$0xff] %vm220, %v1834
    %1875 = vst.msk [vmem:[#allocation2 + $0xc0] sm:$0xff] %vm220, %v1836
    %1876 = vst.msk [vmem:[#allocation2 + $0xc8] sm:$0xff] %vm220, %v1838
    %1877 = vst.msk [vmem:[#allocation2 + $0xd0] sm:$0xff] %vm220, %v1840
    %1878 = vst.msk [vmem:[#allocation2 + $0xd8] sm:$0xff] %vm220, %v1842
    %1879 = vst.msk [vmem:[#allocation2 + $0xe0] sm:$0xff] %vm220, %v1844
    %1880 = vst.msk [vmem:[#allocation2 + $0xe8] sm:$0xff] %vm220, %v1846
    %1881 = vst.msk [vmem:[#allocation2 + $0xf0] sm:$0xff] %vm220, %v1848
    %1882 = vst.msk [vmem:[#allocation2 + $0xf8] sm:$0xff] %vm220, %v1850
    %1915 = vrot.lane.b32.xlu0 %v585, 64
    %v1916 = vpop.permute.xlu0 %1915
    %1917 = vrot.lane.b32.xlu0 %v588, 64
    %v1918 = vpop.permute.xlu0 %1917
    %1919 = vrot.lane.b32.xlu0 %v593, 64
    %v1920 = vpop.permute.xlu0 %1919
    %1921 = vrot.lane.b32.xlu0 %v596, 64
    %v1922 = vpop.permute.xlu0 %1921
    %1923 = vrot.lane.b32.xlu0 %v601, 64
    %v1924 = vpop.permute.xlu0 %1923
    %1925 = vrot.lane.b32.xlu0 %v604, 64
    %v1926 = vpop.permute.xlu0 %1925
    %1927 = vrot.lane.b32.xlu0 %v609, 64
    %v1928 = vpop.permute.xlu0 %1927
    %1929 = vrot.lane.b32.xlu0 %v612, 64
    %v1930 = vpop.permute.xlu0 %1929
    %1931 = vrot.lane.b32.xlu0 %v617, 64
    %v1932 = vpop.permute.xlu0 %1931
    %1933 = vrot.lane.b32.xlu0 %v620, 64
    %v1934 = vpop.permute.xlu0 %1933
    %1935 = vrot.lane.b32.xlu0 %v625, 64
    %v1936 = vpop.permute.xlu0 %1935
    %1937 = vrot.lane.b32.xlu0 %v628, 64
    %v1938 = vpop.permute.xlu0 %1937
    %1939 = vrot.lane.b32.xlu0 %v633, 64
    %v1940 = vpop.permute.xlu0 %1939
    %1941 = vrot.lane.b32.xlu0 %v636, 64
    %v1942 = vpop.permute.xlu0 %1941
    %1943 = vrot.lane.b32.xlu0 %v641, 64
    %v1944 = vpop.permute.xlu0 %1943
    %1945 = vrot.lane.b32.xlu0 %v644, 64
    %v1946 = vpop.permute.xlu0 %1945
    %1947 = vrot.lane.b32.xlu0 %v649, 64
    %v1948 = vpop.permute.xlu0 %1947
    %1949 = vrot.lane.b32.xlu0 %v652, 64
    %v1950 = vpop.permute.xlu0 %1949
    %1951 = vrot.lane.b32.xlu0 %v657, 64
    %v1952 = vpop.permute.xlu0 %1951
    %1953 = vrot.lane.b32.xlu0 %v660, 64
    %v1954 = vpop.permute.xlu0 %1953
    %1955 = vrot.lane.b32.xlu0 %v665, 64
    %v1956 = vpop.permute.xlu0 %1955
    %1957 = vrot.lane.b32.xlu0 %v668, 64
    %v1958 = vpop.permute.xlu0 %1957
    %1959 = vrot.lane.b32.xlu0 %v673, 64
    %v1960 = vpop.permute.xlu0 %1959
    %1961 = vrot.lane.b32.xlu0 %v676, 64
    %v1962 = vpop.permute.xlu0 %1961
    %1963 = vrot.lane.b32.xlu0 %v681, 64
    %v1964 = vpop.permute.xlu0 %1963
    %1965 = vrot.lane.b32.xlu0 %v684, 64
    %v1966 = vpop.permute.xlu0 %1965
    %1967 = vrot.lane.b32.xlu0 %v689, 64
    %v1968 = vpop.permute.xlu0 %1967
    %1969 = vrot.lane.b32.xlu0 %v692, 64
    %v1970 = vpop.permute.xlu0 %1969
    %1971 = vrot.lane.b32.xlu0 %v697, 64
    %v1972 = vpop.permute.xlu0 %1971
    %1973 = vrot.lane.b32.xlu0 %v700, 64
    %v1974 = vpop.permute.xlu0 %1973
    %1975 = vrot.lane.b32.xlu0 %v705, 64
    %v1976 = vpop.permute.xlu0 %1975
    %1977 = vrot.lane.b32.xlu0 %v708, 64
    %v1978 = vpop.permute.xlu0 %1977
    %vm2011 = vcmask 785920
    %2012 = vst.msk [vmem:[#allocation2] sm:$0xff] %vm2011, %v1916
    %2013 = vst.msk [vmem:[#allocation2 + $0x8] sm:$0xff] %vm2011, %v1918
    %2014 = vst.msk [vmem:[#allocation2 + $0x10] sm:$0xff] %vm2011, %v1920
    %2015 = vst.msk [vmem:[#allocation2 + $0x18] sm:$0xff] %vm2011, %v1922
    %2016 = vst.msk [vmem:[#allocation2 + $0x20] sm:$0xff] %vm2011, %v1924
    %2017 = vst.msk [vmem:[#allocation2 + $0x28] sm:$0xff] %vm2011, %v1926
    %2018 = vst.msk [vmem:[#allocation2 + $0x30] sm:$0xff] %vm2011, %v1928
    %2019 = vst.msk [vmem:[#allocation2 + $0x38] sm:$0xff] %vm2011, %v1930
    %2020 = vst.msk [vmem:[#allocation2 + $0x40] sm:$0xff] %vm2011, %v1932
    %2021 = vst.msk [vmem:[#allocation2 + $0x48] sm:$0xff] %vm2011, %v1934
    %2022 = vst.msk [vmem:[#allocation2 + $0x50] sm:$0xff] %vm2011, %v1936
    %2023 = vst.msk [vmem:[#allocation2 + $0x58] sm:$0xff] %vm2011, %v1938
    %2024 = vst.msk [vmem:[#allocation2 + $0x60] sm:$0xff] %vm2011, %v1940
    %2025 = vst.msk [vmem:[#allocation2 + $0x68] sm:$0xff] %vm2011, %v1942
    %2026 = vst.msk [vmem:[#allocation2 + $0x70] sm:$0xff] %vm2011, %v1944
    %2027 = vst.msk [vmem:[#allocation2 + $0x78] sm:$0xff] %vm2011, %v1946
    %2028 = vst.msk [vmem:[#allocation2 + $0x80] sm:$0xff] %vm2011, %v1948
    %2029 = vst.msk [vmem:[#allocation2 + $0x88] sm:$0xff] %vm2011, %v1950
    %2030 = vst.msk [vmem:[#allocation2 + $0x90] sm:$0xff] %vm2011, %v1952
    %2031 = vst.msk [vmem:[#allocation2 + $0x98] sm:$0xff] %vm2011, %v1954
    %2032 = vst.msk [vmem:[#allocation2 + $0xa0] sm:$0xff] %vm2011, %v1956
    %2033 = vst.msk [vmem:[#allocation2 + $0xa8] sm:$0xff] %vm2011, %v1958
    %2034 = vst.msk [vmem:[#allocation2 + $0xb0] sm:$0xff] %vm2011, %v1960
    %2035 = vst.msk [vmem:[#allocation2 + $0xb8] sm:$0xff] %vm2011, %v1962
    %2036 = vst.msk [vmem:[#allocation2 + $0xc0] sm:$0xff] %vm2011, %v1964
    %2037 = vst.msk [vmem:[#allocation2 + $0xc8] sm:$0xff] %vm2011, %v1966
    %2038 = vst.msk [vmem:[#allocation2 + $0xd0] sm:$0xff] %vm2011, %v1968
    %2039 = vst.msk [vmem:[#allocation2 + $0xd8] sm:$0xff] %vm2011, %v1970
    %2040 = vst.msk [vmem:[#allocation2 + $0xe0] sm:$0xff] %vm2011, %v1972
    %2041 = vst.msk [vmem:[#allocation2 + $0xe8] sm:$0xff] %vm2011, %v1974
    %2042 = vst.msk [vmem:[#allocation2 + $0xf0] sm:$0xff] %vm2011, %v1976
    %2043 = vst.msk [vmem:[#allocation2 + $0xf8] sm:$0xff] %vm2011, %v1978
    %2076 = vrot.lane.b32.xlu0 %v1242, 64
    %v2077 = vpop.permute.xlu0 %2076
    %2078 = vrot.lane.b32.xlu0 %v1245, 64
    %v2079 = vpop.permute.xlu0 %2078
    %2080 = vrot.lane.b32.xlu0 %v1250, 64
    %v2081 = vpop.permute.xlu0 %2080
    %2082 = vrot.lane.b32.xlu0 %v1253, 64
    %v2083 = vpop.permute.xlu0 %2082
    %2084 = vrot.lane.b32.xlu0 %v1258, 64
    %v2085 = vpop.permute.xlu0 %2084
    %2086 = vrot.lane.b32.xlu0 %v1261, 64
    %v2087 = vpop.permute.xlu0 %2086
    %2088 = vrot.lane.b32.xlu0 %v1266, 64
    %v2089 = vpop.permute.xlu0 %2088
    %2090 = vrot.lane.b32.xlu0 %v1269, 64
    %v2091 = vpop.permute.xlu0 %2090
    %2092 = vrot.lane.b32.xlu0 %v1274, 64
    %v2093 = vpop.permute.xlu0 %2092
    %2094 = vrot.lane.b32.xlu0 %v1277, 64
    %v2095 = vpop.permute.xlu0 %2094
    %2096 = vrot.lane.b32.xlu0 %v1282, 64
    %v2097 = vpop.permute.xlu0 %2096
    %2098 = vrot.lane.b32.xlu0 %v1285, 64
    %v2099 = vpop.permute.xlu0 %2098
    %2100 = vrot.lane.b32.xlu0 %v1290, 64
    %v2101 = vpop.permute.xlu0 %2100
    %2102 = vrot.lane.b32.xlu0 %v1293, 64
    %v2103 = vpop.permute.xlu0 %2102
    %2104 = vrot.lane.b32.xlu0 %v1298, 64
    %v2105 = vpop.permute.xlu0 %2104
    %2106 = vrot.lane.b32.xlu0 %v1301, 64
    %v2107 = vpop.permute.xlu0 %2106
    %2108 = vrot.lane.b32.xlu0 %v1306, 64
    %v2109 = vpop.permute.xlu0 %2108
    %2110 = vrot.lane.b32.xlu0 %v1309, 64
    %v2111 = vpop.permute.xlu0 %2110
    %2112 = vrot.lane.b32.xlu0 %v1314, 64
    %v2113 = vpop.permute.xlu0 %2112
    %2114 = vrot.lane.b32.xlu0 %v1317, 64
    %v2115 = vpop.permute.xlu0 %2114
    %2116 = vrot.lane.b32.xlu0 %v1322, 64
    %v2117 = vpop.permute.xlu0 %2116
    %2118 = vrot.lane.b32.xlu0 %v1325, 64
    %v2119 = vpop.permute.xlu0 %2118
    %2120 = vrot.lane.b32.xlu0 %v1330, 64
    %v2121 = vpop.permute.xlu0 %2120
    %2122 = vrot.lane.b32.xlu0 %v1333, 64
    %v2123 = vpop.permute.xlu0 %2122
    %2124 = vrot.lane.b32.xlu0 %v1338, 64
    %v2125 = vpop.permute.xlu0 %2124
    %2126 = vrot.lane.b32.xlu0 %v1341, 64
    %v2127 = vpop.permute.xlu0 %2126
    %2128 = vrot.lane.b32.xlu0 %v1346, 64
    %v2129 = vpop.permute.xlu0 %2128
    %2130 = vrot.lane.b32.xlu0 %v1349, 64
    %v2131 = vpop.permute.xlu0 %2130
    %2132 = vrot.lane.b32.xlu0 %v1354, 64
    %v2133 = vpop.permute.xlu0 %2132
    %2134 = vrot.lane.b32.xlu0 %v1357, 64
    %v2135 = vpop.permute.xlu0 %2134
    %2136 = vrot.lane.b32.xlu0 %v1362, 64
    %v2137 = vpop.permute.xlu0 %2136
    %2138 = vrot.lane.b32.xlu0 %v1365, 64
    %v2139 = vpop.permute.xlu0 %2138
    %vm2172 = vcmask 794368
    %2173 = vst.msk [vmem:[#allocation2] sm:$0xff] %vm2172, %v2077
    %2174 = vst.msk [vmem:[#allocation2 + $0x8] sm:$0xff] %vm2172, %v2079
    %2175 = vst.msk [vmem:[#allocation2 + $0x10] sm:$0xff] %vm2172, %v2081
    %2176 = vst.msk [vmem:[#allocation2 + $0x18] sm:$0xff] %vm2172, %v2083
    %2177 = vst.msk [vmem:[#allocation2 + $0x20] sm:$0xff] %vm2172, %v2085
    %2178 = vst.msk [vmem:[#allocation2 + $0x28] sm:$0xff] %vm2172, %v2087
    %2179 = vst.msk [vmem:[#allocation2 + $0x30] sm:$0xff] %vm2172, %v2089
    %2180 = vst.msk [vmem:[#allocation2 + $0x38] sm:$0xff] %vm2172, %v2091
    %2181 = vst.msk [vmem:[#allocation2 + $0x40] sm:$0xff] %vm2172, %v2093
    %2182 = vst.msk [vmem:[#allocation2 + $0x48] sm:$0xff] %vm2172, %v2095
    %2183 = vst.msk [vmem:[#allocation2 + $0x50] sm:$0xff] %vm2172, %v2097
    %2184 = vst.msk [vmem:[#allocation2 + $0x58] sm:$0xff] %vm2172, %v2099
    %2185 = vst.msk [vmem:[#allocation2 + $0x60] sm:$0xff] %vm2172, %v2101
    %2186 = vst.msk [vmem:[#allocation2 + $0x68] sm:$0xff] %vm2172, %v2103
    %2187 = vst.msk [vmem:[#allocation2 + $0x70] sm:$0xff] %vm2172, %v2105
    %2188 = vst.msk [vmem:[#allocation2 + $0x78] sm:$0xff] %vm2172, %v2107
    %2189 = vst.msk [vmem:[#allocation2 + $0x80] sm:$0xff] %vm2172, %v2109
    %2190 = vst.msk [vmem:[#allocation2 + $0x88] sm:$0xff] %vm2172, %v2111
    %2191 = vst.msk [vmem:[#allocation2 + $0x90] sm:$0xff] %vm2172, %v2113
    %2192 = vst.msk [vmem:[#allocation2 + $0x98] sm:$0xff] %vm2172, %v2115
    %2193 = vst.msk [vmem:[#allocation2 + $0xa0] sm:$0xff] %vm2172, %v2117
    %2194 = vst.msk [vmem:[#allocation2 + $0xa8] sm:$0xff] %vm2172, %v2119
    %2195 = vst.msk [vmem:[#allocation2 + $0xb0] sm:$0xff] %vm2172, %v2121
    %2196 = vst.msk [vmem:[#allocation2 + $0xb8] sm:$0xff] %vm2172, %v2123
    %2197 = vst.msk [vmem:[#allocation2 + $0xc0] sm:$0xff] %vm2172, %v2125
    %2198 = vst.msk [vmem:[#allocation2 + $0xc8] sm:$0xff] %vm2172, %v2127
    %2199 = vst.msk [vmem:[#allocation2 + $0xd0] sm:$0xff] %vm2172, %v2129
    %2200 = vst.msk [vmem:[#allocation2 + $0xd8] sm:$0xff] %vm2172, %v2131
    %2201 = vst.msk [vmem:[#allocation2 + $0xe0] sm:$0xff] %vm2172, %v2133
    %2202 = vst.msk [vmem:[#allocation2 + $0xe8] sm:$0xff] %vm2172, %v2135
    %2203 = vst.msk [vmem:[#allocation2 + $0xf0] sm:$0xff] %vm2172, %v2137
    %2204 = vst.msk [vmem:[#allocation2 + $0xf8] sm:$0xff] %vm2172, %v2139
    %vm2205 = vcmask 1048328
    %2206 = vst.msk [vmem:[#allocation2] sm:$0xff] %vm2205, 0.0
    %2207 = vst.msk [vmem:[#allocation2 + $0x8] sm:$0xff] %vm2205, 0.0
    %2208 = vst.msk [vmem:[#allocation2 + $0x10] sm:$0xff] %vm2205, 0.0
    %2209 = vst.msk [vmem:[#allocation2 + $0x18] sm:$0xff] %vm2205, 0.0
    %2210 = vst.msk [vmem:[#allocation2 + $0x20] sm:$0xff] %vm2205, 0.0
    %2211 = vst.msk [vmem:[#allocation2 + $0x28] sm:$0xff] %vm2205, 0.0
    %2212 = vst.msk [vmem:[#allocation2 + $0x30] sm:$0xff] %vm2205, 0.0
    %2213 = vst.msk [vmem:[#allocation2 + $0x38] sm:$0xff] %vm2205, 0.0
    %2214 = vst.msk [vmem:[#allocation2 + $0x40] sm:$0xff] %vm2205, 0.0
    %2215 = vst.msk [vmem:[#allocation2 + $0x48] sm:$0xff] %vm2205, 0.0
    %2216 = vst.msk [vmem:[#allocation2 + $0x50] sm:$0xff] %vm2205, 0.0
    %2217 = vst.msk [vmem:[#allocation2 + $0x58] sm:$0xff] %vm2205, 0.0
    %2218 = vst.msk [vmem:[#allocation2 + $0x60] sm:$0xff] %vm2205, 0.0
    %2219 = vst.msk [vmem:[#allocation2 + $0x68] sm:$0xff] %vm2205, 0.0
    %2220 = vst.msk [vmem:[#allocation2 + $0x70] sm:$0xff] %vm2205, 0.0
    %2221 = vst.msk [vmem:[#allocation2 + $0x78] sm:$0xff] %vm2205, 0.0
    %2222 = vst.msk [vmem:[#allocation2 + $0x80] sm:$0xff] %vm2205, 0.0
    %2223 = vst.msk [vmem:[#allocation2 + $0x88] sm:$0xff] %vm2205, 0.0
    %2224 = vst.msk [vmem:[#allocation2 + $0x90] sm:$0xff] %vm2205, 0.0
    %2225 = vst.msk [vmem:[#allocation2 + $0x98] sm:$0xff] %vm2205, 0.0
    %2226 = vst.msk [vmem:[#allocation2 + $0xa0] sm:$0xff] %vm2205, 0.0
    %2227 = vst.msk [vmem:[#allocation2 + $0xa8] sm:$0xff] %vm2205, 0.0
    %2228 = vst.msk [vmem:[#allocation2 + $0xb0] sm:$0xff] %vm2205, 0.0
    %2229 = vst.msk [vmem:[#allocation2 + $0xb8] sm:$0xff] %vm2205, 0.0
    %2230 = vst.msk [vmem:[#allocation2 + $0xc0] sm:$0xff] %vm2205, 0.0
    %2231 = vst.msk [vmem:[#allocation2 + $0xc8] sm:$0xff] %vm2205, 0.0
    %2232 = vst.msk [vmem:[#allocation2 + $0xd0] sm:$0xff] %vm2205, 0.0
    %2233 = vst.msk [vmem:[#allocation2 + $0xd8] sm:$0xff] %vm2205, 0.0
    %2234 = vst.msk [vmem:[#allocation2 + $0xe0] sm:$0xff] %vm2205, 0.0
    %2235 = vst.msk [vmem:[#allocation2 + $0xe8] sm:$0xff] %vm2205, 0.0
    %2236 = vst.msk [vmem:[#allocation2 + $0xf0] sm:$0xff] %vm2205, 0.0
    %2237 = vst.msk [vmem:[#allocation2 + $0xf8] sm:$0xff] %vm2205, 0.0
    // Predicated region
    $region42: #{tpu_custom_call.1} parent=1 // pred_check
      _
    $region43: #{tpu_custom_call.1} parent=1 // pred_check_branch
      %2239 = sbr.rel (0) target = $region45
    $region44: #{tpu_custom_call.1} parent=1 // pred_region
      %s2241 = ssub.s32 4096, 4096
      %2242 = vsyncadd [#allocation3], %s2241
      %s2243 = sshll.u32 [#allocation2], 4
      %s2244 = int_to_ptr.vmem [resolvable:$true] %s2243
      %2249 = dma.vmem_to_hbm [thread:$0]  %s2244, 4096, %s10, [#allocation3], 128, 128, 8
    $region45: #{tpu_custom_call.1} parent=1 // pred_fallthru
      _
    // Predicated region
    $region46: #{tpu_custom_call.1} parent=1 // pred_check
      _
    $region47: #{tpu_custom_call.1} parent=1 // pred_check_branch
      %2251 = sbr.rel (0) target = $region49
    $region48: #{tpu_custom_call.1} parent=1 // pred_region
      %2252 = dma.done [#allocation3], 4096
    $region49: #{tpu_custom_call.1} parent=1 // pred_fallthru
      _
    %2253 = vsyncpa [#allocation3], 1

</llo_original>
